<compile_context>
chip_gen: v5e
topology: v5e:2x2
jax: 0.10.0
libtpu: 0.0.40
codegen_flags: <defaults>
</compile_context>

<pallas_src>
import jax
import jax.numpy as jnp
from jax.experimental import pallas as pl
from jax.experimental.pallas import tpu as pltpu

# ----------------------------- model config ---------------------------------
BATCH = 2
IN_CH = 3
IMG = 16
PATCH = 8
HIDDEN = 32
NUM_HEADS = 2
HEAD_DIM = HIDDEN // NUM_HEADS
INTERMEDIATE = 64
NUM_LAYERS = 2
EMBED_DIM = 16       # CLIP projection dim
NUM_CLASSES = 8
LN_EPS = 1e-5

GRID_SIDE = IMG // PATCH
N_PATCHES = GRID_SIDE * GRID_SIDE
SEQ = N_PATCHES + 1
PATCH_DIM = IN_CH * PATCH * PATCH

# Lane/sublane-dense padded output slab (one unmasked store per image).
OUT_SUB = 8
OUT_LANE = 128

# bf16 MXU operands (v6e/v7x native); switch to jnp.float32 for exact parity.
MATMUL_DTYPE = jnp.bfloat16


# ----------------------------- in-kernel helpers ------------------------------
def _mm(x, w):
    """MXU matmul: bf16 operands, f32 accumulate."""
    return jnp.dot(x.astype(MATMUL_DTYPE), w.astype(MATMUL_DTYPE),
                   preferred_element_type=jnp.float32)


def _layernorm(x, g, b, eps=LN_EPS):
    """LayerNorm over last dim in f32.  x:(M,D), g/b:(1,D)."""
    x = x.astype(jnp.float32)
    mean = jnp.mean(x, axis=-1, keepdims=True)
    var = jnp.mean((x - mean) ** 2, axis=-1, keepdims=True)
    return (x - mean) * jax.lax.rsqrt(var + eps) * g + b


# ----------------------------- fused kernel ----------------------------------
def _clip_fused_kernel(
    patches_ref,                              # (1, N_PATCHES, PATCH_DIM)
    w_patch_ref,                              # (PATCH_DIM, HIDDEN)
    cls_emb_ref,                              # (1, HIDDEN)
    pos_emb_ref,                              # (SEQ, HIDDEN)
    pre_ln_g_ref, pre_ln_b_ref,               # (1, HIDDEN)
    ln1_g_ref, ln1_b_ref,                     # (L, 1, HIDDEN)
    qkv_w_ref, qkv_b_ref,                     # (L, HIDDEN, 3H), (L, 1, 3H)
    o_w_ref, o_b_ref,                         # (L, HIDDEN, HIDDEN), (L, 1, HIDDEN)
    ln2_g_ref, ln2_b_ref,                     # (L, 1, HIDDEN)
    fc1_w_ref, fc1_b_ref,                     # (L, HIDDEN, INTER), (L, 1, INTER)
    fc2_w_ref, fc2_b_ref,                     # (L, INTER, HIDDEN), (L, 1, HIDDEN)
    post_ln_g_ref, post_ln_b_ref,             # (1, HIDDEN)
    vproj_w_ref,                              # (HIDDEN, EMBED_DIM)
    cls_w_ref, cls_b_ref,                     # (EMBED_DIM, NUM_CLASSES), (1, NUM_CLASSES)
    out_ref,                                  # (1, OUT_SUB, OUT_LANE)
):
    scale = HEAD_DIM ** -0.5

    # --- patch embedding (Conv2d-as-matmul, no bias) ---
    patches = patches_ref[0]                                     # (N_PATCHES, PATCH_DIM)
    patch_emb = _mm(patches, w_patch_ref[...])                   # (N_PATCHES, HIDDEN)

    # --- [CLS] token + position embeddings, pre-LN ---
    h = jnp.concatenate([cls_emb_ref[...], patch_emb], axis=0)   # (SEQ, HIDDEN)
    h = h + pos_emb_ref[...]
    h = _layernorm(h, pre_ln_g_ref[...], pre_ln_b_ref[...])

    # --- transformer blocks (static Python loop, weights resident in VMEM) ---
    for l in range(NUM_LAYERS):
        # self-attention
        resid = h
        hn = _layernorm(h, ln1_g_ref[l], ln1_b_ref[l])
        qkv = _mm(hn, qkv_w_ref[l]) + qkv_b_ref[l]               # (SEQ, 3*HIDDEN)

        head_outs = []
        for hd in range(NUM_HEADS):
            q = qkv[:, hd * HEAD_DIM:(hd + 1) * HEAD_DIM] * scale
            k = qkv[:, HIDDEN + hd * HEAD_DIM:HIDDEN + (hd + 1) * HEAD_DIM]
            v = qkv[:, 2 * HIDDEN + hd * HEAD_DIM:2 * HIDDEN + (hd + 1) * HEAD_DIM]
            # scores = q @ k^T without an explicit transpose
            s = jax.lax.dot_general(
                q.astype(MATMUL_DTYPE), k.astype(MATMUL_DTYPE),
                (((1,), (1,)), ((), ())),
                preferred_element_type=jnp.float32)              # (SEQ, SEQ)
            s = s - jnp.max(s, axis=-1, keepdims=True)
            p = jnp.exp(s)
            p = p * pl.reciprocal(jnp.sum(p, axis=-1, keepdims=True), approx=True)
            head_outs.append(_mm(p, v))                          # (SEQ, HEAD_DIM)

        attn = jnp.concatenate(head_outs, axis=-1)               # (SEQ, HIDDEN)
        attn = _mm(attn, o_w_ref[l]) + o_b_ref[l]
        h = resid + attn

        # MLP (QuickGELU, as in CLIP) — elementwise in f32
        resid = h
        hn = _layernorm(h, ln2_g_ref[l], ln2_b_ref[l])
        m = _mm(hn, fc1_w_ref[l]) + fc1_b_ref[l]
        m = m * jax.nn.sigmoid(1.702 * m)
        h = resid + (_mm(m, fc2_w_ref[l]) + fc2_b_ref[l])

    # --- pooled CLS -> post-LN -> visual projection (no bias) -> classifier ---
    pooled = _layernorm(h[0:1, :], post_ln_g_ref[...], post_ln_b_ref[...])
    features = _mm(pooled, vproj_w_ref[...])                     # (1, EMBED_DIM)
    logits = _mm(features, cls_w_ref[...]) + cls_b_ref[...]      # (1, NUM_CLASSES)

    # lane/sublane-dense padded slab: single unmasked (8,128) store
    slab = jnp.concatenate(
        [logits, jnp.zeros((OUT_SUB - 1, NUM_CLASSES), jnp.float32)], axis=0)
    slab = jnp.concatenate(
        [slab, jnp.zeros((OUT_SUB, OUT_LANE - NUM_CLASSES), jnp.float32)], axis=1)
    out_ref[0] = slab


# ----------------------------- BlockSpec helpers ------------------------------
def _full_spec(shape):
    """Whole array resident in VMEM each grid step (constant block index)."""
    if len(shape) == 2:
        return pl.BlockSpec(shape, lambda b: (0, 0))
    if len(shape) == 3:
        return pl.BlockSpec(shape, lambda b: (0, 0, 0))
    raise ValueError(f"unexpected weight rank: {shape}")


# ----------------------------- parameter init --------------------------------
def init_params(key):
    def nrm(key, shape, scale=0.02):
        return (scale * jax.random.normal(key, shape)).astype(jnp.float32)

    keys = iter(jax.random.split(key, 64))
    params = {
        # Conv2d(IN_CH, HIDDEN, kernel=PATCH, stride=PATCH, bias=False)
        "patch_embed_w": nrm(next(keys), (HIDDEN, IN_CH, PATCH, PATCH)),
        "class_embedding": nrm(next(keys), (HIDDEN,)),
        "pos_embedding": nrm(next(keys), (SEQ, HIDDEN)),
        "pre_ln_g": jnp.ones((HIDDEN,), jnp.float32),
        "pre_ln_b": jnp.zeros((HIDDEN,), jnp.float32),
        "post_ln_g": jnp.ones((HIDDEN,), jnp.float32),
        "post_ln_b": jnp.zeros((HIDDEN,), jnp.float32),
        # visual_projection: Linear(HIDDEN, EMBED_DIM, bias=False), stored (in,out)
        "visual_proj_w": nrm(next(keys), (HIDDEN, EMBED_DIM)),
        # classifier: Linear(EMBED_DIM, NUM_CLASSES), stored (in,out)
        "cls_w": nrm(next(keys), (EMBED_DIM, NUM_CLASSES)),
        "cls_b": jnp.zeros((NUM_CLASSES,), jnp.float32),
        "layers": [],
    }
    for _ in range(NUM_LAYERS):
        layer = {
            "ln1_g": jnp.ones((HIDDEN,), jnp.float32),
            "ln1_b": jnp.zeros((HIDDEN,), jnp.float32),
            "ln2_g": jnp.ones((HIDDEN,), jnp.float32),
            "ln2_b": jnp.zeros((HIDDEN,), jnp.float32),
            "q_w": nrm(next(keys), (HIDDEN, HIDDEN)),
            "q_b": jnp.zeros((HIDDEN,), jnp.float32),
            "k_w": nrm(next(keys), (HIDDEN, HIDDEN)),
            "k_b": jnp.zeros((HIDDEN,), jnp.float32),
            "v_w": nrm(next(keys), (HIDDEN, HIDDEN)),
            "v_b": jnp.zeros((HIDDEN,), jnp.float32),
            "o_w": nrm(next(keys), (HIDDEN, HIDDEN)),
            "o_b": jnp.zeros((HIDDEN,), jnp.float32),
            "fc1_w": nrm(next(keys), (HIDDEN, INTERMEDIATE)),
            "fc1_b": jnp.zeros((INTERMEDIATE,), jnp.float32),
            "fc2_w": nrm(next(keys), (INTERMEDIATE, HIDDEN)),
            "fc2_b": jnp.zeros((HIDDEN,), jnp.float32),
        }
        params["layers"].append(layer)
    return params


# ----------------------------- forward pass -----------------------------------
@jax.jit
def clip_finetuner_forward(pixel_values, params):
    """pixel_values: (B, C, H, W) NCHW float32 -> logits (B, NUM_CLASSES)."""
    B, C, H, W = pixel_values.shape
    p = PATCH
    gh, gw = H // p, W // p
    n_patches = gh * gw

    # Patch extraction (layout plumbing, plain JAX): (C, kh, kw) flatten order
    # to match Conv2d weight flattening (out, in, kh, kw) -> (out, in*kh*kw).
    x = pixel_values.reshape(B, C, gh, p, gw, p)
    patches = x.transpose(0, 2, 4, 1, 3, 5).reshape(B, n_patches, C * p * p)

    w_patch = params["patch_embed_w"].reshape(HIDDEN, C * p * p).T   # (Cpp, HIDDEN)
    cls_emb = params["class_embedding"].reshape(1, HIDDEN)
    pos_emb = params["pos_embedding"]                                # (SEQ, HIDDEN)
    pre_ln_g = params["pre_ln_g"].reshape(1, HIDDEN)
    pre_ln_b = params["pre_ln_b"].reshape(1, HIDDEN)
    post_ln_g = params["post_ln_g"].reshape(1, HIDDEN)
    post_ln_b = params["post_ln_b"].reshape(1, HIDDEN)
    cls_b = params["cls_b"].reshape(1, NUM_CLASSES)

    lay = params["layers"]
    L = NUM_LAYERS
    # Merge Q/K/V into one (HIDDEN, 3*HIDDEN) matmul per layer; stack layers.
    qkv_w = jnp.stack(
        [jnp.concatenate([lay[i]["q_w"], lay[i]["k_w"], lay[i]["v_w"]], axis=1)
         for i in range(L)], axis=0)                                       # (L, H, 3H)
    qkv_b = jnp.stack(
        [jnp.concatenate([lay[i]["q_b"], lay[i]["k_b"], lay[i]["v_b"]], axis=0)
         for i in range(L)], axis=0).reshape(L, 1, 3 * HIDDEN)
    o_w = jnp.stack([lay[i]["o_w"] for i in range(L)], axis=0)
    o_b = jnp.stack([lay[i]["o_b"] for i in range(L)], axis=0).reshape(L, 1, HIDDEN)
    ln1_g = jnp.stack([lay[i]["ln1_g"] for i in range(L)], axis=0).reshape(L, 1, HIDDEN)
    ln1_b = jnp.stack([lay[i]["ln1_b"] for i in range(L)], axis=0).reshape(L, 1, HIDDEN)
    ln2_g = jnp.stack([lay[i]["ln2_g"] for i in range(L)], axis=0).reshape(L, 1, HIDDEN)
    ln2_b = jnp.stack([lay[i]["ln2_b"] for i in range(L)], axis=0).reshape(L, 1, HIDDEN)
    fc1_w = jnp.stack([lay[i]["fc1_w"] for i in range(L)], axis=0)
    fc1_b = jnp.stack([lay[i]["fc1_b"] for i in range(L)], axis=0).reshape(L, 1, INTERMEDIATE)
    fc2_w = jnp.stack([lay[i]["fc2_w"] for i in range(L)], axis=0)
    fc2_b = jnp.stack([lay[i]["fc2_b"] for i in range(L)], axis=0).reshape(L, 1, HIDDEN)

    inputs = [
        patches, w_patch, cls_emb, pos_emb,
        pre_ln_g, pre_ln_b,
        ln1_g, ln1_b, qkv_w, qkv_b, o_w, o_b,
        ln2_g, ln2_b, fc1_w, fc1_b, fc2_w, fc2_b,
        post_ln_g, post_ln_b,
        params["visual_proj_w"], params["cls_w"], cls_b,
    ]

    in_specs = [pl.BlockSpec((1, n_patches, C * p * p), lambda b: (b, 0, 0))]
    in_specs += [_full_spec(arr.shape) for arr in inputs[1:]]

    out_padded = pl.pallas_call(
        _clip_fused_kernel,
        out_shape=jax.ShapeDtypeStruct((B, OUT_SUB, OUT_LANE), jnp.float32),
        grid=(B,),
        in_specs=in_specs,
        out_specs=pl.BlockSpec((1, OUT_SUB, OUT_LANE), lambda b: (b, 0, 0)),
        compiler_params=pltpu.CompilerParams(
            dimension_semantics=("parallel",),   # shards images across v7x's 2 TCs
        ),
    )(*inputs)

    return out_padded[:, 0, :NUM_CLASSES]


if __name__ == "__main__":
    key = jax.random.PRNGKey(0)
    k_params, k_inp = jax.random.split(key)
    params = init_params(k_params)
    pixel_values = jax.random.normal(
        k_inp, (BATCH, IN_CH, IMG, IMG), dtype=jnp.float32)   # NCHW

    logits = clip_finetuner_forward(pixel_values, params)
    jax.block_until_ready(logits)
    assert logits.shape == (BATCH, NUM_CLASSES)
    assert logits.dtype == jnp.float32
    print("KERNEL_OK")
</pallas_src>

<mosaic_0001>
module attributes {stable_mosaic.version = 11 : i64} {
  func.func @_clip_fused_kernel(%arg0: i32, %arg1: memref<1x4x192xf32, #tpu.memory_space<vmem>>, %arg2: memref<192x32xf32, #tpu.memory_space<vmem>>, %arg3: memref<1x32xf32, #tpu.memory_space<vmem>>, %arg4: memref<5x32xf32, #tpu.memory_space<vmem>>, %arg5: memref<1x32xf32, #tpu.memory_space<vmem>>, %arg6: memref<1x32xf32, #tpu.memory_space<vmem>>, %arg7: memref<2x1x32xf32, #tpu.memory_space<vmem>>, %arg8: memref<2x1x32xf32, #tpu.memory_space<vmem>>, %arg9: memref<2x32x96xf32, #tpu.memory_space<vmem>>, %arg10: memref<2x1x96xf32, #tpu.memory_space<vmem>>, %arg11: memref<2x32x32xf32, #tpu.memory_space<vmem>>, %arg12: memref<2x1x32xf32, #tpu.memory_space<vmem>>, %arg13: memref<2x1x32xf32, #tpu.memory_space<vmem>>, %arg14: memref<2x1x32xf32, #tpu.memory_space<vmem>>, %arg15: memref<2x32x64xf32, #tpu.memory_space<vmem>>, %arg16: memref<2x1x64xf32, #tpu.memory_space<vmem>>, %arg17: memref<2x64x32xf32, #tpu.memory_space<vmem>>, %arg18: memref<2x1x32xf32, #tpu.memory_space<vmem>>, %arg19: memref<1x32xf32, #tpu.memory_space<vmem>>, %arg20: memref<1x32xf32, #tpu.memory_space<vmem>>, %arg21: memref<32x16xf32, #tpu.memory_space<vmem>>, %arg22: memref<16x8xf32, #tpu.memory_space<vmem>>, %arg23: memref<1x8xf32, #tpu.memory_space<vmem>>, %arg24: memref<1x8x128xf32, #tpu.memory_space<vmem>>) attributes {dimension_semantics = [#tpu.dimension_semantics<parallel>], iteration_bounds = array<i64: 2>, scalar_prefetch = 0 : i64, scratch_operands = 0 : i64, tpu.core_type = #tpu.core_type<tc>, window_params = [{transform_indices = @transform_0, window_bounds = array<i64: 1, 4, 192>}, {pipeline_mode = #tpu.pipeline_mode<synchronous>, transform_indices = @transform_1, window_bounds = array<i64: 192, 32>}, {pipeline_mode = #tpu.pipeline_mode<synchronous>, transform_indices = @transform_2, window_bounds = array<i64: 1, 32>}, {pipeline_mode = #tpu.pipeline_mode<synchronous>, transform_indices = @transform_3, window_bounds = array<i64: 5, 32>}, {pipeline_mode = #tpu.pipeline_mode<synchronous>, transform_indices = @transform_4, window_bounds = array<i64: 1, 32>}, {pipeline_mode = #tpu.pipeline_mode<synchronous>, transform_indices = @transform_5, window_bounds = array<i64: 1, 32>}, {pipeline_mode = #tpu.pipeline_mode<synchronous>, transform_indices = @transform_6, window_bounds = array<i64: 2, 1, 32>}, {pipeline_mode = #tpu.pipeline_mode<synchronous>, transform_indices = @transform_7, window_bounds = array<i64: 2, 1, 32>}, {pipeline_mode = #tpu.pipeline_mode<synchronous>, transform_indices = @transform_8, window_bounds = array<i64: 2, 32, 96>}, {pipeline_mode = #tpu.pipeline_mode<synchronous>, transform_indices = @transform_9, window_bounds = array<i64: 2, 1, 96>}, {pipeline_mode = #tpu.pipeline_mode<synchronous>, transform_indices = @transform_10, window_bounds = array<i64: 2, 32, 32>}, {pipeline_mode = #tpu.pipeline_mode<synchronous>, transform_indices = @transform_11, window_bounds = array<i64: 2, 1, 32>}, {pipeline_mode = #tpu.pipeline_mode<synchronous>, transform_indices = @transform_12, window_bounds = array<i64: 2, 1, 32>}, {pipeline_mode = #tpu.pipeline_mode<synchronous>, transform_indices = @transform_13, window_bounds = array<i64: 2, 1, 32>}, {pipeline_mode = #tpu.pipeline_mode<synchronous>, transform_indices = @transform_14, window_bounds = array<i64: 2, 32, 64>}, {pipeline_mode = #tpu.pipeline_mode<synchronous>, transform_indices = @transform_15, window_bounds = array<i64: 2, 1, 64>}, {pipeline_mode = #tpu.pipeline_mode<synchronous>, transform_indices = @transform_16, window_bounds = array<i64: 2, 64, 32>}, {pipeline_mode = #tpu.pipeline_mode<synchronous>, transform_indices = @transform_17, window_bounds = array<i64: 2, 1, 32>}, {pipeline_mode = #tpu.pipeline_mode<synchronous>, transform_indices = @transform_18, window_bounds = array<i64: 1, 32>}, {pipeline_mode = #tpu.pipeline_mode<synchronous>, transform_indices = @transform_19, window_bounds = array<i64: 1, 32>}, {pipeline_mode = #tpu.pipeline_mode<synchronous>, transform_indices = @transform_20, window_bounds = array<i64: 32, 16>}, {pipeline_mode = #tpu.pipeline_mode<synchronous>, transform_indices = @transform_21, window_bounds = array<i64: 16, 8>}, {pipeline_mode = #tpu.pipeline_mode<synchronous>, transform_indices = @transform_22, window_bounds = array<i64: 1, 8>}, {transform_indices = @transform_23, window_bounds = array<i64: 1, 8, 128>}]} {
    %c0 = arith.constant 0 : index
    %c0_0 = arith.constant 0 : index
    %c0_1 = arith.constant 0 : index
    %0 = vector.load %arg1[%c0, %c0_0, %c0_1] : memref<1x4x192xf32, #tpu.memory_space<vmem>>, vector<1x4x192xf32>
    %1 = vector.shape_cast %0 : vector<1x4x192xf32> to vector<4x192xf32>
    %c0_2 = arith.constant 0 : index
    %c0_3 = arith.constant 0 : index
    %2 = vector.load %arg2[%c0_2, %c0_3] : memref<192x32xf32, #tpu.memory_space<vmem>>, vector<192x32xf32>
    %3 = arith.truncf %1 : vector<4x192xf32> to vector<4x192xbf16>
    %4 = arith.truncf %2 : vector<192x32xf32> to vector<192x32xbf16>
    %cst = arith.constant dense<0.000000e+00> : vector<4x32xf32>
    %5 = tpu.matmul %3, %4, %cst {dimension_numbers = #tpu.dot_dimension_numbers<[1], [0], [0], [1], [0, 0, 1, 1], [], []>} : vector<4x192xbf16>, vector<192x32xbf16>, vector<4x32xf32> -> vector<4x32xf32>
    %c0_4 = arith.constant 0 : index
    %c0_5 = arith.constant 0 : index
    %6 = vector.load %arg3[%c0_4, %c0_5] : memref<1x32xf32, #tpu.memory_space<vmem>>, vector<1x32xf32>
    %7 = tpu.concatenate %6, %5 in 0 : vector<1x32xf32>, vector<4x32xf32> -> vector<5x32xf32>
    %c0_6 = arith.constant 0 : index
    %c0_7 = arith.constant 0 : index
    %8 = vector.load %arg4[%c0_6, %c0_7] : memref<5x32xf32, #tpu.memory_space<vmem>>, vector<5x32xf32>
    %9 = arith.addf %7, %8 : vector<5x32xf32>
    %c0_8 = arith.constant 0 : index
    %c0_9 = arith.constant 0 : index
    %10 = vector.load %arg5[%c0_8, %c0_9] : memref<1x32xf32, #tpu.memory_space<vmem>>, vector<1x32xf32>
    %c0_10 = arith.constant 0 : index
    %c0_11 = arith.constant 0 : index
    %11 = vector.load %arg6[%c0_10, %c0_11] : memref<1x32xf32, #tpu.memory_space<vmem>>, vector<1x32xf32>
    %cst_12 = arith.constant dense<0.000000e+00> : vector<5xf32>
    %12 = vector.multi_reduction <add>, %9, %cst_12 [1] : vector<5x32xf32> to vector<5xf32>
    %13 = vector.shape_cast %12 : vector<5xf32> to vector<5x1xf32>
    %cst_13 = arith.constant 3.200000e+01 : f32
    %14 = vector.broadcast %cst_13 : f32 to vector<5x1xf32>
    %15 = arith.divf %13, %14 : vector<5x1xf32>
    %16 = vector.broadcast %15 : vector<5x1xf32> to vector<5x32xf32>
    %17 = arith.subf %9, %16 : vector<5x32xf32>
    %18 = arith.mulf %17, %17 : vector<5x32xf32>
    %cst_14 = arith.constant dense<0.000000e+00> : vector<5xf32>
    %19 = vector.multi_reduction <add>, %18, %cst_14 [1] : vector<5x32xf32> to vector<5xf32>
    %20 = vector.shape_cast %19 : vector<5xf32> to vector<5x1xf32>
    %cst_15 = arith.constant 3.200000e+01 : f32
    %21 = vector.broadcast %cst_15 : f32 to vector<5x1xf32>
    %22 = arith.divf %20, %21 : vector<5x1xf32>
    %23 = vector.broadcast %15 : vector<5x1xf32> to vector<5x32xf32>
    %24 = arith.subf %9, %23 : vector<5x32xf32>
    %cst_16 = arith.constant 9.99999974E-6 : f32
    %25 = vector.broadcast %cst_16 : f32 to vector<5x1xf32>
    %26 = arith.addf %22, %25 : vector<5x1xf32>
    %27 = math.rsqrt %26 : vector<5x1xf32>
    %28 = vector.broadcast %27 : vector<5x1xf32> to vector<5x32xf32>
    %29 = arith.mulf %24, %28 : vector<5x32xf32>
    %30 = vector.broadcast %10 : vector<1x32xf32> to vector<5x32xf32>
    %31 = arith.mulf %29, %30 : vector<5x32xf32>
    %32 = vector.broadcast %11 : vector<1x32xf32> to vector<5x32xf32>
    %33 = arith.addf %31, %32 : vector<5x32xf32>
    %c0_17 = arith.constant 0 : index
    %c0_18 = arith.constant 0 : index
    %c0_19 = arith.constant 0 : index
    %34 = vector.load %arg7[%c0_17, %c0_18, %c0_19] : memref<2x1x32xf32, #tpu.memory_space<vmem>>, vector<1x1x32xf32>
    %35 = vector.shape_cast %34 : vector<1x1x32xf32> to vector<1x32xf32>
    %c0_20 = arith.constant 0 : index
    %c0_21 = arith.constant 0 : index
    %c0_22 = arith.constant 0 : index
    %36 = vector.load %arg8[%c0_20, %c0_21, %c0_22] : memref<2x1x32xf32, #tpu.memory_space<vmem>>, vector<1x1x32xf32>
    %37 = vector.shape_cast %36 : vector<1x1x32xf32> to vector<1x32xf32>
    %cst_23 = arith.constant dense<0.000000e+00> : vector<5xf32>
    %38 = vector.multi_reduction <add>, %33, %cst_23 [1] : vector<5x32xf32> to vector<5xf32>
    %39 = vector.shape_cast %38 : vector<5xf32> to vector<5x1xf32>
    %cst_24 = arith.constant 3.200000e+01 : f32
    %40 = vector.broadcast %cst_24 : f32 to vector<5x1xf32>
    %41 = arith.divf %39, %40 : vector<5x1xf32>
    %42 = vector.broadcast %41 : vector<5x1xf32> to vector<5x32xf32>
    %43 = arith.subf %33, %42 : vector<5x32xf32>
    %44 = arith.mulf %43, %43 : vector<5x32xf32>
    %cst_25 = arith.constant dense<0.000000e+00> : vector<5xf32>
    %45 = vector.multi_reduction <add>, %44, %cst_25 [1] : vector<5x32xf32> to vector<5xf32>
    %46 = vector.shape_cast %45 : vector<5xf32> to vector<5x1xf32>
    %cst_26 = arith.constant 3.200000e+01 : f32
    %47 = vector.broadcast %cst_26 : f32 to vector<5x1xf32>
    %48 = arith.divf %46, %47 : vector<5x1xf32>
    %49 = vector.broadcast %41 : vector<5x1xf32> to vector<5x32xf32>
    %50 = arith.subf %33, %49 : vector<5x32xf32>
    %cst_27 = arith.constant 9.99999974E-6 : f32
    %51 = vector.broadcast %cst_27 : f32 to vector<5x1xf32>
    %52 = arith.addf %48, %51 : vector<5x1xf32>
    %53 = math.rsqrt %52 : vector<5x1xf32>
    %54 = vector.broadcast %53 : vector<5x1xf32> to vector<5x32xf32>
    %55 = arith.mulf %50, %54 : vector<5x32xf32>
    %56 = vector.broadcast %35 : vector<1x32xf32> to vector<5x32xf32>
    %57 = arith.mulf %55, %56 : vector<5x32xf32>
    %58 = vector.broadcast %37 : vector<1x32xf32> to vector<5x32xf32>
    %59 = arith.addf %57, %58 : vector<5x32xf32>
    %c0_28 = arith.constant 0 : index
    %c0_29 = arith.constant 0 : index
    %c0_30 = arith.constant 0 : index
    %60 = vector.load %arg9[%c0_28, %c0_29, %c0_30] : memref<2x32x96xf32, #tpu.memory_space<vmem>>, vector<1x32x96xf32>
    %61 = vector.shape_cast %60 : vector<1x32x96xf32> to vector<32x96xf32>
    %62 = arith.truncf %59 : vector<5x32xf32> to vector<5x32xbf16>
    %63 = arith.truncf %61 : vector<32x96xf32> to vector<32x96xbf16>
    %cst_31 = arith.constant dense<0.000000e+00> : vector<5x96xf32>
    %64 = tpu.matmul %62, %63, %cst_31 {dimension_numbers = #tpu.dot_dimension_numbers<[1], [0], [0], [1], [0, 0, 1, 1], [], []>} : vector<5x32xbf16>, vector<32x96xbf16>, vector<5x96xf32> -> vector<5x96xf32>
    %c0_32 = arith.constant 0 : index
    %c0_33 = arith.constant 0 : index
    %c0_34 = arith.constant 0 : index
    %65 = vector.load %arg10[%c0_32, %c0_33, %c0_34] : memref<2x1x96xf32, #tpu.memory_space<vmem>>, vector<1x1x96xf32>
    %66 = vector.shape_cast %65 : vector<1x1x96xf32> to vector<1x96xf32>
    %67 = vector.broadcast %66 : vector<1x96xf32> to vector<5x96xf32>
    %68 = arith.addf %64, %67 : vector<5x96xf32>
    %69 = vector.extract_strided_slice %68 {offsets = [0, 0], sizes = [5, 16], strides = [1, 1]} : vector<5x96xf32> to vector<5x16xf32>
    %cst_35 = arith.constant 2.500000e-01 : f32
    %70 = vector.broadcast %cst_35 : f32 to vector<5x16xf32>
    %71 = arith.mulf %69, %70 : vector<5x16xf32>
    %72 = vector.extract_strided_slice %68 {offsets = [0, 32], sizes = [5, 16], strides = [1, 1]} : vector<5x96xf32> to vector<5x16xf32>
    %73 = vector.extract_strided_slice %68 {offsets = [0, 64], sizes = [5, 16], strides = [1, 1]} : vector<5x96xf32> to vector<5x16xf32>
    %74 = arith.truncf %71 : vector<5x16xf32> to vector<5x16xbf16>
    %75 = arith.truncf %72 : vector<5x16xf32> to vector<5x16xbf16>
    %cst_36 = arith.constant dense<0.000000e+00> : vector<5x5xf32>
    %76 = tpu.matmul %74, %75, %cst_36 {dimension_numbers = #tpu.dot_dimension_numbers<[1], [1], [0], [0], [0, 0, 1, 0], [], []>} : vector<5x16xbf16>, vector<5x16xbf16>, vector<5x5xf32> -> vector<5x5xf32>
    %cst_37 = arith.constant dense<0xFF800000> : vector<5xf32>
    %77 = vector.multi_reduction <maximumf>, %76, %cst_37 [1] : vector<5x5xf32> to vector<5xf32>
    %78 = vector.shape_cast %77 : vector<5xf32> to vector<5x1xf32>
    %79 = vector.broadcast %78 : vector<5x1xf32> to vector<5x5xf32>
    %80 = arith.subf %76, %79 : vector<5x5xf32>
    %81 = math.exp %80 : vector<5x5xf32>
    %cst_38 = arith.constant dense<0.000000e+00> : vector<5xf32>
    %82 = vector.multi_reduction <add>, %81, %cst_38 [1] : vector<5x5xf32> to vector<5xf32>
    %83 = vector.shape_cast %82 : vector<5xf32> to vector<5x1xf32>
    %84 = tpu.reciprocal %83 {approx = true} : vector<5x1xf32> -> vector<5x1xf32>
    %85 = vector.broadcast %84 : vector<5x1xf32> to vector<5x5xf32>
    %86 = arith.mulf %81, %85 : vector<5x5xf32>
    %87 = arith.truncf %86 : vector<5x5xf32> to vector<5x5xbf16>
    %88 = arith.truncf %73 : vector<5x16xf32> to vector<5x16xbf16>
    %cst_39 = arith.constant dense<0.000000e+00> : vector<5x16xf32>
    %89 = tpu.matmul %87, %88, %cst_39 {dimension_numbers = #tpu.dot_dimension_numbers<[1], [0], [0], [1], [0, 0, 1, 1], [], []>} : vector<5x5xbf16>, vector<5x16xbf16>, vector<5x16xf32> -> vector<5x16xf32>
    %90 = vector.extract_strided_slice %68 {offsets = [0, 16], sizes = [5, 16], strides = [1, 1]} : vector<5x96xf32> to vector<5x16xf32>
    %cst_40 = arith.constant 2.500000e-01 : f32
    %91 = vector.broadcast %cst_40 : f32 to vector<5x16xf32>
    %92 = arith.mulf %90, %91 : vector<5x16xf32>
    %93 = vector.extract_strided_slice %68 {offsets = [0, 48], sizes = [5, 16], strides = [1, 1]} : vector<5x96xf32> to vector<5x16xf32>
    %94 = vector.extract_strided_slice %68 {offsets = [0, 80], sizes = [5, 16], strides = [1, 1]} : vector<5x96xf32> to vector<5x16xf32>
    %95 = arith.truncf %92 : vector<5x16xf32> to vector<5x16xbf16>
    %96 = arith.truncf %93 : vector<5x16xf32> to vector<5x16xbf16>
    %cst_41 = arith.constant dense<0.000000e+00> : vector<5x5xf32>
    %97 = tpu.matmul %95, %96, %cst_41 {dimension_numbers = #tpu.dot_dimension_numbers<[1], [1], [0], [0], [0, 0, 1, 0], [], []>} : vector<5x16xbf16>, vector<5x16xbf16>, vector<5x5xf32> -> vector<5x5xf32>
    %cst_42 = arith.constant dense<0xFF800000> : vector<5xf32>
    %98 = vector.multi_reduction <maximumf>, %97, %cst_42 [1] : vector<5x5xf32> to vector<5xf32>
    %99 = vector.shape_cast %98 : vector<5xf32> to vector<5x1xf32>
    %100 = vector.broadcast %99 : vector<5x1xf32> to vector<5x5xf32>
    %101 = arith.subf %97, %100 : vector<5x5xf32>
    %102 = math.exp %101 : vector<5x5xf32>
    %cst_43 = arith.constant dense<0.000000e+00> : vector<5xf32>
    %103 = vector.multi_reduction <add>, %102, %cst_43 [1] : vector<5x5xf32> to vector<5xf32>
    %104 = vector.shape_cast %103 : vector<5xf32> to vector<5x1xf32>
    %105 = tpu.reciprocal %104 {approx = true} : vector<5x1xf32> -> vector<5x1xf32>
    %106 = vector.broadcast %105 : vector<5x1xf32> to vector<5x5xf32>
    %107 = arith.mulf %102, %106 : vector<5x5xf32>
    %108 = arith.truncf %107 : vector<5x5xf32> to vector<5x5xbf16>
    %109 = arith.truncf %94 : vector<5x16xf32> to vector<5x16xbf16>
    %cst_44 = arith.constant dense<0.000000e+00> : vector<5x16xf32>
    %110 = tpu.matmul %108, %109, %cst_44 {dimension_numbers = #tpu.dot_dimension_numbers<[1], [0], [0], [1], [0, 0, 1, 1], [], []>} : vector<5x5xbf16>, vector<5x16xbf16>, vector<5x16xf32> -> vector<5x16xf32>
    %111 = tpu.concatenate %89, %110 in 1 : vector<5x16xf32>, vector<5x16xf32> -> vector<5x32xf32>
    %c0_45 = arith.constant 0 : index
    %c0_46 = arith.constant 0 : index
    %c0_47 = arith.constant 0 : index
    %112 = vector.load %arg11[%c0_45, %c0_46, %c0_47] : memref<2x32x32xf32, #tpu.memory_space<vmem>>, vector<1x32x32xf32>
    %113 = vector.shape_cast %112 : vector<1x32x32xf32> to vector<32x32xf32>
    %114 = arith.truncf %111 : vector<5x32xf32> to vector<5x32xbf16>
    %115 = arith.truncf %113 : vector<32x32xf32> to vector<32x32xbf16>
    %cst_48 = arith.constant dense<0.000000e+00> : vector<5x32xf32>
    %116 = tpu.matmul %114, %115, %cst_48 {dimension_numbers = #tpu.dot_dimension_numbers<[1], [0], [0], [1], [0, 0, 1, 1], [], []>} : vector<5x32xbf16>, vector<32x32xbf16>, vector<5x32xf32> -> vector<5x32xf32>
    %c0_49 = arith.constant 0 : index
    %c0_50 = arith.constant 0 : index
    %c0_51 = arith.constant 0 : index
    %117 = vector.load %arg12[%c0_49, %c0_50, %c0_51] : memref<2x1x32xf32, #tpu.memory_space<vmem>>, vector<1x1x32xf32>
    %118 = vector.shape_cast %117 : vector<1x1x32xf32> to vector<1x32xf32>
    %119 = vector.broadcast %118 : vector<1x32xf32> to vector<5x32xf32>
    %120 = arith.addf %116, %119 : vector<5x32xf32>
    %121 = arith.addf %33, %120 : vector<5x32xf32>
    %c0_52 = arith.constant 0 : index
    %c0_53 = arith.constant 0 : index
    %c0_54 = arith.constant 0 : index
    %122 = vector.load %arg13[%c0_52, %c0_53, %c0_54] : memref<2x1x32xf32, #tpu.memory_space<vmem>>, vector<1x1x32xf32>
    %123 = vector.shape_cast %122 : vector<1x1x32xf32> to vector<1x32xf32>
    %c0_55 = arith.constant 0 : index
    %c0_56 = arith.constant 0 : index
    %c0_57 = arith.constant 0 : index
    %124 = vector.load %arg14[%c0_55, %c0_56, %c0_57] : memref<2x1x32xf32, #tpu.memory_space<vmem>>, vector<1x1x32xf32>
    %125 = vector.shape_cast %124 : vector<1x1x32xf32> to vector<1x32xf32>
    %cst_58 = arith.constant dense<0.000000e+00> : vector<5xf32>
    %126 = vector.multi_reduction <add>, %121, %cst_58 [1] : vector<5x32xf32> to vector<5xf32>
    %127 = vector.shape_cast %126 : vector<5xf32> to vector<5x1xf32>
    %cst_59 = arith.constant 3.200000e+01 : f32
    %128 = vector.broadcast %cst_59 : f32 to vector<5x1xf32>
    %129 = arith.divf %127, %128 : vector<5x1xf32>
    %130 = vector.broadcast %129 : vector<5x1xf32> to vector<5x32xf32>
    %131 = arith.subf %121, %130 : vector<5x32xf32>
    %132 = arith.mulf %131, %131 : vector<5x32xf32>
    %cst_60 = arith.constant dense<0.000000e+00> : vector<5xf32>
    %133 = vector.multi_reduction <add>, %132, %cst_60 [1] : vector<5x32xf32> to vector<5xf32>
    %134 = vector.shape_cast %133 : vector<5xf32> to vector<5x1xf32>
    %cst_61 = arith.constant 3.200000e+01 : f32
    %135 = vector.broadcast %cst_61 : f32 to vector<5x1xf32>
    %136 = arith.divf %134, %135 : vector<5x1xf32>
    %137 = vector.broadcast %129 : vector<5x1xf32> to vector<5x32xf32>
    %138 = arith.subf %121, %137 : vector<5x32xf32>
    %cst_62 = arith.constant 9.99999974E-6 : f32
    %139 = vector.broadcast %cst_62 : f32 to vector<5x1xf32>
    %140 = arith.addf %136, %139 : vector<5x1xf32>
    %141 = math.rsqrt %140 : vector<5x1xf32>
    %142 = vector.broadcast %141 : vector<5x1xf32> to vector<5x32xf32>
    %143 = arith.mulf %138, %142 : vector<5x32xf32>
    %144 = vector.broadcast %123 : vector<1x32xf32> to vector<5x32xf32>
    %145 = arith.mulf %143, %144 : vector<5x32xf32>
    %146 = vector.broadcast %125 : vector<1x32xf32> to vector<5x32xf32>
    %147 = arith.addf %145, %146 : vector<5x32xf32>
    %c0_63 = arith.constant 0 : index
    %c0_64 = arith.constant 0 : index
    %c0_65 = arith.constant 0 : index
    %148 = vector.load %arg15[%c0_63, %c0_64, %c0_65] : memref<2x32x64xf32, #tpu.memory_space<vmem>>, vector<1x32x64xf32>
    %149 = vector.shape_cast %148 : vector<1x32x64xf32> to vector<32x64xf32>
    %150 = arith.truncf %147 : vector<5x32xf32> to vector<5x32xbf16>
    %151 = arith.truncf %149 : vector<32x64xf32> to vector<32x64xbf16>
    %cst_66 = arith.constant dense<0.000000e+00> : vector<5x64xf32>
    %152 = tpu.matmul %150, %151, %cst_66 {dimension_numbers = #tpu.dot_dimension_numbers<[1], [0], [0], [1], [0, 0, 1, 1], [], []>} : vector<5x32xbf16>, vector<32x64xbf16>, vector<5x64xf32> -> vector<5x64xf32>
    %c0_67 = arith.constant 0 : index
    %c0_68 = arith.constant 0 : index
    %c0_69 = arith.constant 0 : index
    %153 = vector.load %arg16[%c0_67, %c0_68, %c0_69] : memref<2x1x64xf32, #tpu.memory_space<vmem>>, vector<1x1x64xf32>
    %154 = vector.shape_cast %153 : vector<1x1x64xf32> to vector<1x64xf32>
    %155 = vector.broadcast %154 : vector<1x64xf32> to vector<5x64xf32>
    %156 = arith.addf %152, %155 : vector<5x64xf32>
    %cst_70 = arith.constant 1.702000e+00 : f32
    %157 = vector.broadcast %cst_70 : f32 to vector<5x64xf32>
    %158 = arith.mulf %157, %156 : vector<5x64xf32>
    %159 = arith.negf %158 : vector<5x64xf32>
    %160 = math.exp %159 : vector<5x64xf32>
    %cst_71 = arith.constant 1.000000e+00 : f32
    %161 = vector.broadcast %cst_71 : f32 to vector<5x64xf32>
    %162 = arith.addf %161, %160 : vector<5x64xf32>
    %163 = arith.divf %161, %162 : vector<5x64xf32>
    %164 = arith.mulf %156, %163 : vector<5x64xf32>
    %c0_72 = arith.constant 0 : index
    %c0_73 = arith.constant 0 : index
    %c0_74 = arith.constant 0 : index
    %165 = vector.load %arg17[%c0_72, %c0_73, %c0_74] : memref<2x64x32xf32, #tpu.memory_space<vmem>>, vector<1x64x32xf32>
    %166 = vector.shape_cast %165 : vector<1x64x32xf32> to vector<64x32xf32>
    %167 = arith.truncf %164 : vector<5x64xf32> to vector<5x64xbf16>
    %168 = arith.truncf %166 : vector<64x32xf32> to vector<64x32xbf16>
    %cst_75 = arith.constant dense<0.000000e+00> : vector<5x32xf32>
    %169 = tpu.matmul %167, %168, %cst_75 {dimension_numbers = #tpu.dot_dimension_numbers<[1], [0], [0], [1], [0, 0, 1, 1], [], []>} : vector<5x64xbf16>, vector<64x32xbf16>, vector<5x32xf32> -> vector<5x32xf32>
    %c0_76 = arith.constant 0 : index
    %c0_77 = arith.constant 0 : index
    %c0_78 = arith.constant 0 : index
    %170 = vector.load %arg18[%c0_76, %c0_77, %c0_78] : memref<2x1x32xf32, #tpu.memory_space<vmem>>, vector<1x1x32xf32>
    %171 = vector.shape_cast %170 : vector<1x1x32xf32> to vector<1x32xf32>
    %172 = vector.broadcast %171 : vector<1x32xf32> to vector<5x32xf32>
    %173 = arith.addf %169, %172 : vector<5x32xf32>
    %174 = arith.addf %121, %173 : vector<5x32xf32>
    %c1 = arith.constant 1 : index
    %c0_79 = arith.constant 0 : index
    %c0_80 = arith.constant 0 : index
    %175 = vector.load %arg7[%c1, %c0_79, %c0_80] : memref<2x1x32xf32, #tpu.memory_space<vmem>>, vector<1x1x32xf32>
    %176 = vector.shape_cast %175 : vector<1x1x32xf32> to vector<1x32xf32>
    %c1_81 = arith.constant 1 : index
    %c0_82 = arith.constant 0 : index
    %c0_83 = arith.constant 0 : index
    %177 = vector.load %arg8[%c1_81, %c0_82, %c0_83] : memref<2x1x32xf32, #tpu.memory_space<vmem>>, vector<1x1x32xf32>
    %178 = vector.shape_cast %177 : vector<1x1x32xf32> to vector<1x32xf32>
    %cst_84 = arith.constant dense<0.000000e+00> : vector<5xf32>
    %179 = vector.multi_reduction <add>, %174, %cst_84 [1] : vector<5x32xf32> to vector<5xf32>
    %180 = vector.shape_cast %179 : vector<5xf32> to vector<5x1xf32>
    %cst_85 = arith.constant 3.200000e+01 : f32
    %181 = vector.broadcast %cst_85 : f32 to vector<5x1xf32>
    %182 = arith.divf %180, %181 : vector<5x1xf32>
    %183 = vector.broadcast %182 : vector<5x1xf32> to vector<5x32xf32>
    %184 = arith.subf %174, %183 : vector<5x32xf32>
    %185 = arith.mulf %184, %184 : vector<5x32xf32>
    %cst_86 = arith.constant dense<0.000000e+00> : vector<5xf32>
    %186 = vector.multi_reduction <add>, %185, %cst_86 [1] : vector<5x32xf32> to vector<5xf32>
    %187 = vector.shape_cast %186 : vector<5xf32> to vector<5x1xf32>
    %cst_87 = arith.constant 3.200000e+01 : f32
    %188 = vector.broadcast %cst_87 : f32 to vector<5x1xf32>
    %189 = arith.divf %187, %188 : vector<5x1xf32>
    %190 = vector.broadcast %182 : vector<5x1xf32> to vector<5x32xf32>
    %191 = arith.subf %174, %190 : vector<5x32xf32>
    %cst_88 = arith.constant 9.99999974E-6 : f32
    %192 = vector.broadcast %cst_88 : f32 to vector<5x1xf32>
    %193 = arith.addf %189, %192 : vector<5x1xf32>
    %194 = math.rsqrt %193 : vector<5x1xf32>
    %195 = vector.broadcast %194 : vector<5x1xf32> to vector<5x32xf32>
    %196 = arith.mulf %191, %195 : vector<5x32xf32>
    %197 = vector.broadcast %176 : vector<1x32xf32> to vector<5x32xf32>
    %198 = arith.mulf %196, %197 : vector<5x32xf32>
    %199 = vector.broadcast %178 : vector<1x32xf32> to vector<5x32xf32>
    %200 = arith.addf %198, %199 : vector<5x32xf32>
    %c1_89 = arith.constant 1 : index
    %c0_90 = arith.constant 0 : index
    %c0_91 = arith.constant 0 : index
    %201 = vector.load %arg9[%c1_89, %c0_90, %c0_91] : memref<2x32x96xf32, #tpu.memory_space<vmem>>, vector<1x32x96xf32>
    %202 = vector.shape_cast %201 : vector<1x32x96xf32> to vector<32x96xf32>
    %203 = arith.truncf %200 : vector<5x32xf32> to vector<5x32xbf16>
    %204 = arith.truncf %202 : vector<32x96xf32> to vector<32x96xbf16>
    %cst_92 = arith.constant dense<0.000000e+00> : vector<5x96xf32>
    %205 = tpu.matmul %203, %204, %cst_92 {dimension_numbers = #tpu.dot_dimension_numbers<[1], [0], [0], [1], [0, 0, 1, 1], [], []>} : vector<5x32xbf16>, vector<32x96xbf16>, vector<5x96xf32> -> vector<5x96xf32>
    %c1_93 = arith.constant 1 : index
    %c0_94 = arith.constant 0 : index
    %c0_95 = arith.constant 0 : index
    %206 = vector.load %arg10[%c1_93, %c0_94, %c0_95] : memref<2x1x96xf32, #tpu.memory_space<vmem>>, vector<1x1x96xf32>
    %207 = vector.shape_cast %206 : vector<1x1x96xf32> to vector<1x96xf32>
    %208 = vector.broadcast %207 : vector<1x96xf32> to vector<5x96xf32>
    %209 = arith.addf %205, %208 : vector<5x96xf32>
    %210 = vector.extract_strided_slice %209 {offsets = [0, 0], sizes = [5, 16], strides = [1, 1]} : vector<5x96xf32> to vector<5x16xf32>
    %cst_96 = arith.constant 2.500000e-01 : f32
    %211 = vector.broadcast %cst_96 : f32 to vector<5x16xf32>
    %212 = arith.mulf %210, %211 : vector<5x16xf32>
    %213 = vector.extract_strided_slice %209 {offsets = [0, 32], sizes = [5, 16], strides = [1, 1]} : vector<5x96xf32> to vector<5x16xf32>
    %214 = vector.extract_strided_slice %209 {offsets = [0, 64], sizes = [5, 16], strides = [1, 1]} : vector<5x96xf32> to vector<5x16xf32>
    %215 = arith.truncf %212 : vector<5x16xf32> to vector<5x16xbf16>
    %216 = arith.truncf %213 : vector<5x16xf32> to vector<5x16xbf16>
    %cst_97 = arith.constant dense<0.000000e+00> : vector<5x5xf32>
    %217 = tpu.matmul %215, %216, %cst_97 {dimension_numbers = #tpu.dot_dimension_numbers<[1], [1], [0], [0], [0, 0, 1, 0], [], []>} : vector<5x16xbf16>, vector<5x16xbf16>, vector<5x5xf32> -> vector<5x5xf32>
    %cst_98 = arith.constant dense<0xFF800000> : vector<5xf32>
    %218 = vector.multi_reduction <maximumf>, %217, %cst_98 [1] : vector<5x5xf32> to vector<5xf32>
    %219 = vector.shape_cast %218 : vector<5xf32> to vector<5x1xf32>
    %220 = vector.broadcast %219 : vector<5x1xf32> to vector<5x5xf32>
    %221 = arith.subf %217, %220 : vector<5x5xf32>
    %222 = math.exp %221 : vector<5x5xf32>
    %cst_99 = arith.constant dense<0.000000e+00> : vector<5xf32>
    %223 = vector.multi_reduction <add>, %222, %cst_99 [1] : vector<5x5xf32> to vector<5xf32>
    %224 = vector.shape_cast %223 : vector<5xf32> to vector<5x1xf32>
    %225 = tpu.reciprocal %224 {approx = true} : vector<5x1xf32> -> vector<5x1xf32>
    %226 = vector.broadcast %225 : vector<5x1xf32> to vector<5x5xf32>
    %227 = arith.mulf %222, %226 : vector<5x5xf32>
    %228 = arith.truncf %227 : vector<5x5xf32> to vector<5x5xbf16>
    %229 = arith.truncf %214 : vector<5x16xf32> to vector<5x16xbf16>
    %cst_100 = arith.constant dense<0.000000e+00> : vector<5x16xf32>
    %230 = tpu.matmul %228, %229, %cst_100 {dimension_numbers = #tpu.dot_dimension_numbers<[1], [0], [0], [1], [0, 0, 1, 1], [], []>} : vector<5x5xbf16>, vector<5x16xbf16>, vector<5x16xf32> -> vector<5x16xf32>
    %231 = vector.extract_strided_slice %209 {offsets = [0, 16], sizes = [5, 16], strides = [1, 1]} : vector<5x96xf32> to vector<5x16xf32>
    %cst_101 = arith.constant 2.500000e-01 : f32
    %232 = vector.broadcast %cst_101 : f32 to vector<5x16xf32>
    %233 = arith.mulf %231, %232 : vector<5x16xf32>
    %234 = vector.extract_strided_slice %209 {offsets = [0, 48], sizes = [5, 16], strides = [1, 1]} : vector<5x96xf32> to vector<5x16xf32>
    %235 = vector.extract_strided_slice %209 {offsets = [0, 80], sizes = [5, 16], strides = [1, 1]} : vector<5x96xf32> to vector<5x16xf32>
    %236 = arith.truncf %233 : vector<5x16xf32> to vector<5x16xbf16>
    %237 = arith.truncf %234 : vector<5x16xf32> to vector<5x16xbf16>
    %cst_102 = arith.constant dense<0.000000e+00> : vector<5x5xf32>
    %238 = tpu.matmul %236, %237, %cst_102 {dimension_numbers = #tpu.dot_dimension_numbers<[1], [1], [0], [0], [0, 0, 1, 0], [], []>} : vector<5x16xbf16>, vector<5x16xbf16>, vector<5x5xf32> -> vector<5x5xf32>
    %cst_103 = arith.constant dense<0xFF800000> : vector<5xf32>
    %239 = vector.multi_reduction <maximumf>, %238, %cst_103 [1] : vector<5x5xf32> to vector<5xf32>
    %240 = vector.shape_cast %239 : vector<5xf32> to vector<5x1xf32>
    %241 = vector.broadcast %240 : vector<5x1xf32> to vector<5x5xf32>
    %242 = arith.subf %238, %241 : vector<5x5xf32>
    %243 = math.exp %242 : vector<5x5xf32>
    %cst_104 = arith.constant dense<0.000000e+00> : vector<5xf32>
    %244 = vector.multi_reduction <add>, %243, %cst_104 [1] : vector<5x5xf32> to vector<5xf32>
    %245 = vector.shape_cast %244 : vector<5xf32> to vector<5x1xf32>
    %246 = tpu.reciprocal %245 {approx = true} : vector<5x1xf32> -> vector<5x1xf32>
    %247 = vector.broadcast %246 : vector<5x1xf32> to vector<5x5xf32>
    %248 = arith.mulf %243, %247 : vector<5x5xf32>
    %249 = arith.truncf %248 : vector<5x5xf32> to vector<5x5xbf16>
    %250 = arith.truncf %235 : vector<5x16xf32> to vector<5x16xbf16>
    %cst_105 = arith.constant dense<0.000000e+00> : vector<5x16xf32>
    %251 = tpu.matmul %249, %250, %cst_105 {dimension_numbers = #tpu.dot_dimension_numbers<[1], [0], [0], [1], [0, 0, 1, 1], [], []>} : vector<5x5xbf16>, vector<5x16xbf16>, vector<5x16xf32> -> vector<5x16xf32>
    %252 = tpu.concatenate %230, %251 in 1 : vector<5x16xf32>, vector<5x16xf32> -> vector<5x32xf32>
    %c1_106 = arith.constant 1 : index
    %c0_107 = arith.constant 0 : index
    %c0_108 = arith.constant 0 : index
    %253 = vector.load %arg11[%c1_106, %c0_107, %c0_108] : memref<2x32x32xf32, #tpu.memory_space<vmem>>, vector<1x32x32xf32>
    %254 = vector.shape_cast %253 : vector<1x32x32xf32> to vector<32x32xf32>
    %255 = arith.truncf %252 : vector<5x32xf32> to vector<5x32xbf16>
    %256 = arith.truncf %254 : vector<32x32xf32> to vector<32x32xbf16>
    %cst_109 = arith.constant dense<0.000000e+00> : vector<5x32xf32>
    %257 = tpu.matmul %255, %256, %cst_109 {dimension_numbers = #tpu.dot_dimension_numbers<[1], [0], [0], [1], [0, 0, 1, 1], [], []>} : vector<5x32xbf16>, vector<32x32xbf16>, vector<5x32xf32> -> vector<5x32xf32>
    %c1_110 = arith.constant 1 : index
    %c0_111 = arith.constant 0 : index
    %c0_112 = arith.constant 0 : index
    %258 = vector.load %arg12[%c1_110, %c0_111, %c0_112] : memref<2x1x32xf32, #tpu.memory_space<vmem>>, vector<1x1x32xf32>
    %259 = vector.shape_cast %258 : vector<1x1x32xf32> to vector<1x32xf32>
    %260 = vector.broadcast %259 : vector<1x32xf32> to vector<5x32xf32>
    %261 = arith.addf %257, %260 : vector<5x32xf32>
    %262 = arith.addf %174, %261 : vector<5x32xf32>
    %c1_113 = arith.constant 1 : index
    %c0_114 = arith.constant 0 : index
    %c0_115 = arith.constant 0 : index
    %263 = vector.load %arg13[%c1_113, %c0_114, %c0_115] : memref<2x1x32xf32, #tpu.memory_space<vmem>>, vector<1x1x32xf32>
    %264 = vector.shape_cast %263 : vector<1x1x32xf32> to vector<1x32xf32>
    %c1_116 = arith.constant 1 : index
    %c0_117 = arith.constant 0 : index
    %c0_118 = arith.constant 0 : index
    %265 = vector.load %arg14[%c1_116, %c0_117, %c0_118] : memref<2x1x32xf32, #tpu.memory_space<vmem>>, vector<1x1x32xf32>
    %266 = vector.shape_cast %265 : vector<1x1x32xf32> to vector<1x32xf32>
    %cst_119 = arith.constant dense<0.000000e+00> : vector<5xf32>
    %267 = vector.multi_reduction <add>, %262, %cst_119 [1] : vector<5x32xf32> to vector<5xf32>
    %268 = vector.shape_cast %267 : vector<5xf32> to vector<5x1xf32>
    %cst_120 = arith.constant 3.200000e+01 : f32
    %269 = vector.broadcast %cst_120 : f32 to vector<5x1xf32>
    %270 = arith.divf %268, %269 : vector<5x1xf32>
    %271 = vector.broadcast %270 : vector<5x1xf32> to vector<5x32xf32>
    %272 = arith.subf %262, %271 : vector<5x32xf32>
    %273 = arith.mulf %272, %272 : vector<5x32xf32>
    %cst_121 = arith.constant dense<0.000000e+00> : vector<5xf32>
    %274 = vector.multi_reduction <add>, %273, %cst_121 [1] : vector<5x32xf32> to vector<5xf32>
    %275 = vector.shape_cast %274 : vector<5xf32> to vector<5x1xf32>
    %cst_122 = arith.constant 3.200000e+01 : f32
    %276 = vector.broadcast %cst_122 : f32 to vector<5x1xf32>
    %277 = arith.divf %275, %276 : vector<5x1xf32>
    %278 = vector.broadcast %270 : vector<5x1xf32> to vector<5x32xf32>
    %279 = arith.subf %262, %278 : vector<5x32xf32>
    %cst_123 = arith.constant 9.99999974E-6 : f32
    %280 = vector.broadcast %cst_123 : f32 to vector<5x1xf32>
    %281 = arith.addf %277, %280 : vector<5x1xf32>
    %282 = math.rsqrt %281 : vector<5x1xf32>
    %283 = vector.broadcast %282 : vector<5x1xf32> to vector<5x32xf32>
    %284 = arith.mulf %279, %283 : vector<5x32xf32>
    %285 = vector.broadcast %264 : vector<1x32xf32> to vector<5x32xf32>
    %286 = arith.mulf %284, %285 : vector<5x32xf32>
    %287 = vector.broadcast %266 : vector<1x32xf32> to vector<5x32xf32>
    %288 = arith.addf %286, %287 : vector<5x32xf32>
    %c1_124 = arith.constant 1 : index
    %c0_125 = arith.constant 0 : index
    %c0_126 = arith.constant 0 : index
    %289 = vector.load %arg15[%c1_124, %c0_125, %c0_126] : memref<2x32x64xf32, #tpu.memory_space<vmem>>, vector<1x32x64xf32>
    %290 = vector.shape_cast %289 : vector<1x32x64xf32> to vector<32x64xf32>
    %291 = arith.truncf %288 : vector<5x32xf32> to vector<5x32xbf16>
    %292 = arith.truncf %290 : vector<32x64xf32> to vector<32x64xbf16>
    %cst_127 = arith.constant dense<0.000000e+00> : vector<5x64xf32>
    %293 = tpu.matmul %291, %292, %cst_127 {dimension_numbers = #tpu.dot_dimension_numbers<[1], [0], [0], [1], [0, 0, 1, 1], [], []>} : vector<5x32xbf16>, vector<32x64xbf16>, vector<5x64xf32> -> vector<5x64xf32>
    %c1_128 = arith.constant 1 : index
    %c0_129 = arith.constant 0 : index
    %c0_130 = arith.constant 0 : index
    %294 = vector.load %arg16[%c1_128, %c0_129, %c0_130] : memref<2x1x64xf32, #tpu.memory_space<vmem>>, vector<1x1x64xf32>
    %295 = vector.shape_cast %294 : vector<1x1x64xf32> to vector<1x64xf32>
    %296 = vector.broadcast %295 : vector<1x64xf32> to vector<5x64xf32>
    %297 = arith.addf %293, %296 : vector<5x64xf32>
    %cst_131 = arith.constant 1.702000e+00 : f32
    %298 = vector.broadcast %cst_131 : f32 to vector<5x64xf32>
    %299 = arith.mulf %298, %297 : vector<5x64xf32>
    %300 = arith.negf %299 : vector<5x64xf32>
    %301 = math.exp %300 : vector<5x64xf32>
    %cst_132 = arith.constant 1.000000e+00 : f32
    %302 = vector.broadcast %cst_132 : f32 to vector<5x64xf32>
    %303 = arith.addf %302, %301 : vector<5x64xf32>
    %304 = arith.divf %302, %303 : vector<5x64xf32>
    %305 = arith.mulf %297, %304 : vector<5x64xf32>
    %c1_133 = arith.constant 1 : index
    %c0_134 = arith.constant 0 : index
    %c0_135 = arith.constant 0 : index
    %306 = vector.load %arg17[%c1_133, %c0_134, %c0_135] : memref<2x64x32xf32, #tpu.memory_space<vmem>>, vector<1x64x32xf32>
    %307 = vector.shape_cast %306 : vector<1x64x32xf32> to vector<64x32xf32>
    %308 = arith.truncf %305 : vector<5x64xf32> to vector<5x64xbf16>
    %309 = arith.truncf %307 : vector<64x32xf32> to vector<64x32xbf16>
    %cst_136 = arith.constant dense<0.000000e+00> : vector<5x32xf32>
    %310 = tpu.matmul %308, %309, %cst_136 {dimension_numbers = #tpu.dot_dimension_numbers<[1], [0], [0], [1], [0, 0, 1, 1], [], []>} : vector<5x64xbf16>, vector<64x32xbf16>, vector<5x32xf32> -> vector<5x32xf32>
    %c1_137 = arith.constant 1 : index
    %c0_138 = arith.constant 0 : index
    %c0_139 = arith.constant 0 : index
    %311 = vector.load %arg18[%c1_137, %c0_138, %c0_139] : memref<2x1x32xf32, #tpu.memory_space<vmem>>, vector<1x1x32xf32>
    %312 = vector.shape_cast %311 : vector<1x1x32xf32> to vector<1x32xf32>
    %313 = vector.broadcast %312 : vector<1x32xf32> to vector<5x32xf32>
    %314 = arith.addf %310, %313 : vector<5x32xf32>
    %315 = arith.addf %262, %314 : vector<5x32xf32>
    %316 = vector.extract_strided_slice %315 {offsets = [0, 0], sizes = [1, 32], strides = [1, 1]} : vector<5x32xf32> to vector<1x32xf32>
    %c0_140 = arith.constant 0 : index
    %c0_141 = arith.constant 0 : index
    %317 = vector.load %arg19[%c0_140, %c0_141] : memref<1x32xf32, #tpu.memory_space<vmem>>, vector<1x32xf32>
    %c0_142 = arith.constant 0 : index
    %c0_143 = arith.constant 0 : index
    %318 = vector.load %arg20[%c0_142, %c0_143] : memref<1x32xf32, #tpu.memory_space<vmem>>, vector<1x32xf32>
    %cst_144 = arith.constant dense<0.000000e+00> : vector<1xf32>
    %319 = vector.multi_reduction <add>, %316, %cst_144 [1] : vector<1x32xf32> to vector<1xf32>
    %320 = vector.shape_cast %319 : vector<1xf32> to vector<1x1xf32>
    %cst_145 = arith.constant 3.200000e+01 : f32
    %321 = vector.broadcast %cst_145 : f32 to vector<1x1xf32>
    %322 = arith.divf %320, %321 : vector<1x1xf32>
    %323 = vector.broadcast %322 : vector<1x1xf32> to vector<1x32xf32>
    %324 = arith.subf %316, %323 : vector<1x32xf32>
    %325 = arith.mulf %324, %324 : vector<1x32xf32>
    %cst_146 = arith.constant dense<0.000000e+00> : vector<1xf32>
    %326 = vector.multi_reduction <add>, %325, %cst_146 [1] : vector<1x32xf32> to vector<1xf32>
    %327 = vector.shape_cast %326 : vector<1xf32> to vector<1x1xf32>
    %cst_147 = arith.constant 3.200000e+01 : f32
    %328 = vector.broadcast %cst_147 : f32 to vector<1x1xf32>
    %329 = arith.divf %327, %328 : vector<1x1xf32>
    %330 = vector.broadcast %322 : vector<1x1xf32> to vector<1x32xf32>
    %331 = arith.subf %316, %330 : vector<1x32xf32>
    %cst_148 = arith.constant 9.99999974E-6 : f32
    %332 = vector.broadcast %cst_148 : f32 to vector<1x1xf32>
    %333 = arith.addf %329, %332 : vector<1x1xf32>
    %334 = math.rsqrt %333 : vector<1x1xf32>
    %335 = vector.broadcast %334 : vector<1x1xf32> to vector<1x32xf32>
    %336 = arith.mulf %331, %335 : vector<1x32xf32>
    %337 = arith.mulf %336, %317 : vector<1x32xf32>
    %338 = arith.addf %337, %318 : vector<1x32xf32>
    %c0_149 = arith.constant 0 : index
    %c0_150 = arith.constant 0 : index
    %339 = vector.load %arg21[%c0_149, %c0_150] : memref<32x16xf32, #tpu.memory_space<vmem>>, vector<32x16xf32>
    %340 = arith.truncf %338 : vector<1x32xf32> to vector<1x32xbf16>
    %341 = arith.truncf %339 : vector<32x16xf32> to vector<32x16xbf16>
    %cst_151 = arith.constant dense<0.000000e+00> : vector<1x16xf32>
    %342 = tpu.matmul %340, %341, %cst_151 {dimension_numbers = #tpu.dot_dimension_numbers<[1], [0], [0], [1], [0, 0, 1, 1], [], []>} : vector<1x32xbf16>, vector<32x16xbf16>, vector<1x16xf32> -> vector<1x16xf32>
    %c0_152 = arith.constant 0 : index
    %c0_153 = arith.constant 0 : index
    %343 = vector.load %arg22[%c0_152, %c0_153] : memref<16x8xf32, #tpu.memory_space<vmem>>, vector<16x8xf32>
    %344 = arith.truncf %342 : vector<1x16xf32> to vector<1x16xbf16>
    %345 = arith.truncf %343 : vector<16x8xf32> to vector<16x8xbf16>
    %cst_154 = arith.constant dense<0.000000e+00> : vector<1x8xf32>
    %346 = tpu.matmul %344, %345, %cst_154 {dimension_numbers = #tpu.dot_dimension_numbers<[1], [0], [0], [1], [0, 0, 1, 1], [], []>} : vector<1x16xbf16>, vector<16x8xbf16>, vector<1x8xf32> -> vector<1x8xf32>
    %c0_155 = arith.constant 0 : index
    %c0_156 = arith.constant 0 : index
    %347 = vector.load %arg23[%c0_155, %c0_156] : memref<1x8xf32, #tpu.memory_space<vmem>>, vector<1x8xf32>
    %348 = arith.addf %346, %347 : vector<1x8xf32>
    %cst_157 = arith.constant 0.000000e+00 : f32
    %349 = vector.broadcast %cst_157 : f32 to vector<7x8xf32>
    %350 = tpu.concatenate %348, %349 in 0 : vector<1x8xf32>, vector<7x8xf32> -> vector<8x8xf32>
    %cst_158 = arith.constant 0.000000e+00 : f32
    %351 = vector.broadcast %cst_158 : f32 to vector<8x120xf32>
    %352 = tpu.concatenate %350, %351 in 1 : vector<8x8xf32>, vector<8x120xf32> -> vector<8x128xf32>
    %c0_159 = arith.constant 0 : index
    %c0_160 = arith.constant 0 : index
    %c0_161 = arith.constant 0 : index
    %353 = vector.load %arg24[%c0_159, %c0_160, %c0_161] : memref<1x8x128xf32, #tpu.memory_space<vmem>>, vector<1x8x128xf32>
    %354 = vector.shape_cast %353 : vector<1x8x128xf32> to vector<8x128xf32>
    %355 = vector.shape_cast %352 : vector<8x128xf32> to vector<1x8x128xf32>
    tpu.vector_store %arg24[%c0_159, %c0_160, %c0_161], %355 {strides = array<i32>} : memref<1x8x128xf32, #tpu.memory_space<vmem>>, vector<1x8x128xf32>,
    return
  }
  func.func @transform_0(%arg0: i32) -> (i32, i32, i32) {
    %c0_i32 = arith.constant 0 : i32
    %c0_i32_0 = arith.constant 0 : i32
    %c0_i32_1 = arith.constant 0 : i32
    return %arg0, %c0_i32, %c0_i32_0 : i32, i32, i32
  }
  func.func @transform_1(%arg0: i32) -> (i32, i32) {
    %c0_i32 = arith.constant 0 : i32
    %c0_i32_0 = arith.constant 0 : i32
    %c0_i32_1 = arith.constant 0 : i32
    return %c0_i32, %c0_i32_0 : i32, i32
  }
  func.func @transform_2(%arg0: i32) -> (i32, i32) {
    %c0_i32 = arith.constant 0 : i32
    %c0_i32_0 = arith.constant 0 : i32
    %c0_i32_1 = arith.constant 0 : i32
    return %c0_i32, %c0_i32_0 : i32, i32
  }
  func.func @transform_3(%arg0: i32) -> (i32, i32) {
    %c0_i32 = arith.constant 0 : i32
    %c0_i32_0 = arith.constant 0 : i32
    %c0_i32_1 = arith.constant 0 : i32
    return %c0_i32, %c0_i32_0 : i32, i32
  }
  func.func @transform_4(%arg0: i32) -> (i32, i32) {
    %c0_i32 = arith.constant 0 : i32
    %c0_i32_0 = arith.constant 0 : i32
    %c0_i32_1 = arith.constant 0 : i32
    return %c0_i32, %c0_i32_0 : i32, i32
  }
  func.func @transform_5(%arg0: i32) -> (i32, i32) {
    %c0_i32 = arith.constant 0 : i32
    %c0_i32_0 = arith.constant 0 : i32
    %c0_i32_1 = arith.constant 0 : i32
    return %c0_i32, %c0_i32_0 : i32, i32
  }
  func.func @transform_6(%arg0: i32) -> (i32, i32, i32) {
    %c0_i32 = arith.constant 0 : i32
    %c0_i32_0 = arith.constant 0 : i32
    %c0_i32_1 = arith.constant 0 : i32
    %c0_i32_2 = arith.constant 0 : i32
    return %c0_i32, %c0_i32_0, %c0_i32_1 : i32, i32, i32
  }
  func.func @transform_7(%arg0: i32) -> (i32, i32, i32) {
    %c0_i32 = arith.constant 0 : i32
    %c0_i32_0 = arith.constant 0 : i32
    %c0_i32_1 = arith.constant 0 : i32
    %c0_i32_2 = arith.constant 0 : i32
    return %c0_i32, %c0_i32_0, %c0_i32_1 : i32, i32, i32
  }
  func.func @transform_8(%arg0: i32) -> (i32, i32, i32) {
    %c0_i32 = arith.constant 0 : i32
    %c0_i32_0 = arith.constant 0 : i32
    %c0_i32_1 = arith.constant 0 : i32
    %c0_i32_2 = arith.constant 0 : i32
    return %c0_i32, %c0_i32_0, %c0_i32_1 : i32, i32, i32
  }
  func.func @transform_9(%arg0: i32) -> (i32, i32, i32) {
    %c0_i32 = arith.constant 0 : i32
    %c0_i32_0 = arith.constant 0 : i32
    %c0_i32_1 = arith.constant 0 : i32
    %c0_i32_2 = arith.constant 0 : i32
    return %c0_i32, %c0_i32_0, %c0_i32_1 : i32, i32, i32
  }
  func.func @transform_10(%arg0: i32) -> (i32, i32, i32) {
    %c0_i32 = arith.constant 0 : i32
    %c0_i32_0 = arith.constant 0 : i32
    %c0_i32_1 = arith.constant 0 : i32
    %c0_i32_2 = arith.constant 0 : i32
    return %c0_i32, %c0_i32_0, %c0_i32_1 : i32, i32, i32
  }
  func.func @transform_11(%arg0: i32) -> (i32, i32, i32) {
    %c0_i32 = arith.constant 0 : i32
    %c0_i32_0 = arith.constant 0 : i32
    %c0_i32_1 = arith.constant 0 : i32
    %c0_i32_2 = arith.constant 0 : i32
    return %c0_i32, %c0_i32_0, %c0_i32_1 : i32, i32, i32
  }
  func.func @transform_12(%arg0: i32) -> (i32, i32, i32) {
    %c0_i32 = arith.constant 0 : i32
    %c0_i32_0 = arith.constant 0 : i32
    %c0_i32_1 = arith.constant 0 : i32
    %c0_i32_2 = arith.constant 0 : i32
    return %c0_i32, %c0_i32_0, %c0_i32_1 : i32, i32, i32
  }
  func.func @transform_13(%arg0: i32) -> (i32, i32, i32) {
    %c0_i32 = arith.constant 0 : i32
    %c0_i32_0 = arith.constant 0 : i32
    %c0_i32_1 = arith.constant 0 : i32
    %c0_i32_2 = arith.constant 0 : i32
    return %c0_i32, %c0_i32_0, %c0_i32_1 : i32, i32, i32
  }
  func.func @transform_14(%arg0: i32) -> (i32, i32, i32) {
    %c0_i32 = arith.constant 0 : i32
    %c0_i32_0 = arith.constant 0 : i32
    %c0_i32_1 = arith.constant 0 : i32
    %c0_i32_2 = arith.constant 0 : i32
    return %c0_i32, %c0_i32_0, %c0_i32_1 : i32, i32, i32
  }
  func.func @transform_15(%arg0: i32) -> (i32, i32, i32) {
    %c0_i32 = arith.constant 0 : i32
    %c0_i32_0 = arith.constant 0 : i32
    %c0_i32_1 = arith.constant 0 : i32
    %c0_i32_2 = arith.constant 0 : i32
    return %c0_i32, %c0_i32_0, %c0_i32_1 : i32, i32, i32
  }
  func.func @transform_16(%arg0: i32) -> (i32, i32, i32) {
    %c0_i32 = arith.constant 0 : i32
    %c0_i32_0 = arith.constant 0 : i32
    %c0_i32_1 = arith.constant 0 : i32
    %c0_i32_2 = arith.constant 0 : i32
    return %c0_i32, %c0_i32_0, %c0_i32_1 : i32, i32, i32
  }
  func.func @transform_17(%arg0: i32) -> (i32, i32, i32) {
    %c0_i32 = arith.constant 0 : i32
    %c0_i32_0 = arith.constant 0 : i32
    %c0_i32_1 = arith.constant 0 : i32
    %c0_i32_2 = arith.constant 0 : i32
    return %c0_i32, %c0_i32_0, %c0_i32_1 : i32, i32, i32
  }
  func.func @transform_18(%arg0: i32) -> (i32, i32) {
    %c0_i32 = arith.constant 0 : i32
    %c0_i32_0 = arith.constant 0 : i32
    %c0_i32_1 = arith.constant 0 : i32
    return %c0_i32, %c0_i32_0 : i32, i32
  }
  func.func @transform_19(%arg0: i32) -> (i32, i32) {
    %c0_i32 = arith.constant 0 : i32
    %c0_i32_0 = arith.constant 0 : i32
    %c0_i32_1 = arith.constant 0 : i32
    return %c0_i32, %c0_i32_0 : i32, i32
  }
  func.func @transform_20(%arg0: i32) -> (i32, i32) {
    %c0_i32 = arith.constant 0 : i32
    %c0_i32_0 = arith.constant 0 : i32
    %c0_i32_1 = arith.constant 0 : i32
    return %c0_i32, %c0_i32_0 : i32, i32
  }
  func.func @transform_21(%arg0: i32) -> (i32, i32) {
    %c0_i32 = arith.constant 0 : i32
    %c0_i32_0 = arith.constant 0 : i32
    %c0_i32_1 = arith.constant 0 : i32
    return %c0_i32, %c0_i32_0 : i32, i32
  }
  func.func @transform_22(%arg0: i32) -> (i32, i32) {
    %c0_i32 = arith.constant 0 : i32
    %c0_i32_0 = arith.constant 0 : i32
    %c0_i32_1 = arith.constant 0 : i32
    return %c0_i32, %c0_i32_0 : i32, i32
  }
  func.func @transform_23(%arg0: i32) -> (i32, i32, i32) {
    %c0_i32 = arith.constant 0 : i32
    %c0_i32_0 = arith.constant 0 : i32
    %c0_i32_1 = arith.constant 0 : i32
    return %arg0, %c0_i32, %c0_i32_0 : i32, i32, i32
  }
}

</mosaic_0001>

<llo_original>
// kernel: clip_finetuner_forward.1
$region0: #{clip_finetuner_forward.1}
  #allocation0 [shape = 'u32[]', space=smem, size = 0x4, offset = 0x4, fixed_abs, tag = 'smem constant byte address 0x4 - core index']
  #allocation1 [shape = 'u32[72,128]{1,0:T(1,128)}', space=vmem, size = 0x9000, scoped, tag = 'internal scratch']
  %s0 = inlined_call_operand.vmem [shape: f32[2,4,192], index: 0, kind: input, shape index: {}]
  %s1 = inlined_call_operand.vmem [shape: f32[192,32], index: 1, kind: input, shape index: {}]
  %s2 = inlined_call_operand.vmem [shape: f32[1,32], index: 2, kind: input, shape index: {}]
  %s3 = inlined_call_operand.vmem [shape: f32[5,32], index: 3, kind: input, shape index: {}]
  %s4 = inlined_call_operand.vmem [shape: f32[1,32], index: 4, kind: input, shape index: {}]
  %s5 = inlined_call_operand.vmem [shape: f32[1,32], index: 5, kind: input, shape index: {}]
  %s6 = inlined_call_operand.vmem [shape: f32[2,1,32], index: 6, kind: input, shape index: {}]
  %s7 = inlined_call_operand.vmem [shape: f32[2,1,32], index: 7, kind: input, shape index: {}]
  %s8 = inlined_call_operand.vmem [shape: f32[2,32,96], index: 8, kind: input, shape index: {}]
  %s9 = inlined_call_operand.vmem [shape: f32[2,1,96], index: 9, kind: input, shape index: {}]
  %s10 = inlined_call_operand.vmem [shape: f32[2,32,32], index: 10, kind: input, shape index: {}]
  %s11 = inlined_call_operand.vmem [shape: f32[2,1,32], index: 11, kind: input, shape index: {}]
  %s12 = inlined_call_operand.vmem [shape: f32[2,1,32], index: 12, kind: input, shape index: {}]
  %s13 = inlined_call_operand.vmem [shape: f32[2,1,32], index: 13, kind: input, shape index: {}]
  %s14 = inlined_call_operand.vmem [shape: f32[2,32,64], index: 14, kind: input, shape index: {}]
  %s15 = inlined_call_operand.vmem [shape: f32[2,1,64], index: 15, kind: input, shape index: {}]
  %s16 = inlined_call_operand.vmem [shape: f32[2,64,32], index: 16, kind: input, shape index: {}]
  %s17 = inlined_call_operand.vmem [shape: f32[2,1,32], index: 17, kind: input, shape index: {}]
  %s18 = inlined_call_operand.vmem [shape: f32[1,32], index: 18, kind: input, shape index: {}]
  %s19 = inlined_call_operand.vmem [shape: f32[1,32], index: 19, kind: input, shape index: {}]
  %s20 = inlined_call_operand.vmem [shape: f32[32,16], index: 20, kind: input, shape index: {}]
  %s21 = inlined_call_operand.vmem [shape: f32[16,8], index: 21, kind: input, shape index: {}]
  %s22 = inlined_call_operand.vmem [shape: f32[1,8], index: 22, kind: input, shape index: {}]
  %s23 = inlined_call_operand.vmem [shape: f32[2,8,128], index: 23, kind: output, shape index: {}]
  %s24 = sld [smem:[#allocation0]]
  $region125: #{clip_finetuner_forward.1} parent=0
    _
  %s26 = ssub.s32 1, %s24
  %s27 = scalar_select 0, %s26, %s24
  loop: start=0, step=1, limit=4
  $region2: #{clip_finetuner_forward.1} parent=0 // loop_pre_header
    _
  $region3: #{clip_finetuner_forward.1} parent=0 // loop_header
    %s29 = sphi 0, %s33
    %p30 = scmp.ge.s32.totalorder %s29, 4
    %s39 = sphi 0, %s41
    %s42 = sphi 0, %s39
    %s43 = sphi 0, %s42
    %s59 = sphi 0, %s43
    %s63 = sphi 0, %s63
    %s65 = sphi 0, %s63
    %s66 = sphi 0, %s65
    %s80 = sphi 0, %s66
    %s84 = sphi 0, %s84
    %s86 = sphi 0, %s84
    %s87 = sphi 0, %s86
    %s101 = sphi 0, %s87
    %s105 = sphi 0, %s105
    %s107 = sphi 0, %s105
    %s108 = sphi 0, %s107
    %s122 = sphi 0, %s108
    %s126 = sphi 0, %s126
    %s128 = sphi 0, %s126
    %s129 = sphi 0, %s128
    %s143 = sphi 0, %s129
    %s147 = sphi 0, %s147
    %s149 = sphi 0, %s147
    %s150 = sphi 0, %s149
    %s164 = sphi 0, %s150
    %s168 = sphi 0, %s168
    %s170 = sphi 0, %s168
    %s171 = sphi 0, %s170
    %s185 = sphi 0, %s171
    %s189 = sphi 0, %s189
    %s191 = sphi 0, %s189
    %s192 = sphi 0, %s191
    %s206 = sphi 0, %s192
    %s210 = sphi 0, %s210
    %s212 = sphi 0, %s210
    %s213 = sphi 0, %s212
    %s227 = sphi 0, %s213
    %s231 = sphi 0, %s231
    %s233 = sphi 0, %s231
    %s234 = sphi 0, %s233
    %s248 = sphi 0, %s234
    %s252 = sphi 0, %s252
    %s254 = sphi 0, %s252
    %s255 = sphi 0, %s254
    %s269 = sphi 0, %s255
    %s273 = sphi 0, %s273
    %s275 = sphi 0, %s273
    %s276 = sphi 0, %s275
    %s290 = sphi 0, %s276
    %s294 = sphi 0, %s294
    %s296 = sphi 0, %s294
    %s297 = sphi 0, %s296
    %s311 = sphi 0, %s297
    %s315 = sphi 0, %s315
    %s317 = sphi 0, %s315
    %s318 = sphi 0, %s317
    %s332 = sphi 0, %s318
    %s336 = sphi 0, %s336
    %s338 = sphi 0, %s336
    %s339 = sphi 0, %s338
    %s353 = sphi 0, %s339
    %s357 = sphi 0, %s357
    %s359 = sphi 0, %s357
    %s360 = sphi 0, %s359
    %s374 = sphi 0, %s360
    %s378 = sphi 0, %s378
    %s380 = sphi 0, %s378
    %s381 = sphi 0, %s380
    %s395 = sphi 0, %s381
    %s399 = sphi 0, %s399
    %s401 = sphi 0, %s399
    %s402 = sphi 0, %s401
    %s416 = sphi 0, %s402
    %s420 = sphi 0, %s420
    %s422 = sphi 0, %s420
    %s423 = sphi 0, %s422
    %s437 = sphi 0, %s423
    %s441 = sphi 0, %s441
    %s443 = sphi 0, %s441
    %s444 = sphi 0, %s443
    %s458 = sphi 0, %s444
    %s462 = sphi 0, %s462
    %s464 = sphi 0, %s462
    %s465 = sphi 0, %s464
    %s479 = sphi 0, %s465
    %s483 = sphi 0, %s483
    %s485 = sphi 0, %s483
    %s486 = sphi 0, %s485
    %s500 = sphi 0, %s486
    %s504 = sphi 0, %s504
    %s506 = sphi 0, %s504
    %s507 = sphi 0, %s506
    %s521 = sphi 0, %s507
    %s527 = sphi 0, %s529
    %s530 = sphi 0, %s527
    %s531 = sphi 0, %s530
    %s547 = sphi 0, %s531
  $region4: #{clip_finetuner_forward.1} parent=0 // loop_header_branch
    %32 = sbr.rel (%p30) target = $region8
  $region5: #{clip_finetuner_forward.1} parent=0 // loop_body
    %s34 = ssub.s32 %s29, 1
    %s35 = ssub.s32 %s29, 2
    %s36 = sadd.s32 %s29, 1
    %s37 = ssub.s32 %s29, %s36
    %p38 = scmp.eq.s32.totalorder %s37, 0
    %s40 = sadd.s32 %s39, 1
    %s41 = scalar_select %p38, %s39, %s40
    %p44 = pneg %p38
    %p45 = scmp.eq.s32.totalorder %s29, 1
    %p46 = por %p44, %p45
    %p47 = scmp.ne.s32.totalorder %s39, %s42
    %p48 = scmp.eq.s32.totalorder %s29, 0
    %p49 = por %p47, %p48
    %p50 = scmp.ne.s32.totalorder %s39, %s42
    %p51 = scmp.eq.s32.totalorder %s34, 1
    %p52 = por %p50, %p51
    %p53 = scmp.ne.s32.totalorder %s42, %s43
    %p54 = scmp.eq.s32.totalorder %s34, 0
    %p55 = por %p53, %p54
    %p56 = scmp.ne.s32.totalorder %s42, %s43
    %p57 = scmp.eq.s32.totalorder %s35, 1
    %p58 = por %p56, %p57
    %p60 = scmp.ne.s32.totalorder %s43, %s59
    %p61 = scmp.eq.s32.totalorder %s35, 0
    %p62 = por %p60, %p61
    %s64 = sadd.s32 %s63, 1
    %p67 = scmp.eq.s32.totalorder %s29, 1
    %p68 = scmp.ne.s32.totalorder %s63, %s65
    %p69 = scmp.eq.s32.totalorder %s29, 0
    %p70 = por %p68, %p69
    %p71 = scmp.ne.s32.totalorder %s63, %s65
    %p72 = scmp.eq.s32.totalorder %s34, 1
    %p73 = por %p71, %p72
    %p74 = scmp.ne.s32.totalorder %s65, %s66
    %p75 = scmp.eq.s32.totalorder %s34, 0
    %p76 = por %p74, %p75
    %p77 = scmp.ne.s32.totalorder %s65, %s66
    %p78 = scmp.eq.s32.totalorder %s35, 1
    %p79 = por %p77, %p78
    %p81 = scmp.ne.s32.totalorder %s66, %s80
    %p82 = scmp.eq.s32.totalorder %s35, 0
    %p83 = por %p81, %p82
    %s85 = sadd.s32 %s84, 1
    %p88 = scmp.eq.s32.totalorder %s29, 1
    %p89 = scmp.ne.s32.totalorder %s84, %s86
    %p90 = scmp.eq.s32.totalorder %s29, 0
    %p91 = por %p89, %p90
    %p92 = scmp.ne.s32.totalorder %s84, %s86
    %p93 = scmp.eq.s32.totalorder %s34, 1
    %p94 = por %p92, %p93
    %p95 = scmp.ne.s32.totalorder %s86, %s87
    %p96 = scmp.eq.s32.totalorder %s34, 0
    %p97 = por %p95, %p96
    %p98 = scmp.ne.s32.totalorder %s86, %s87
    %p99 = scmp.eq.s32.totalorder %s35, 1
    %p100 = por %p98, %p99
    %p102 = scmp.ne.s32.totalorder %s87, %s101
    %p103 = scmp.eq.s32.totalorder %s35, 0
    %p104 = por %p102, %p103
    %s106 = sadd.s32 %s105, 1
    %p109 = scmp.eq.s32.totalorder %s29, 1
    %p110 = scmp.ne.s32.totalorder %s105, %s107
    %p111 = scmp.eq.s32.totalorder %s29, 0
    %p112 = por %p110, %p111
    %p113 = scmp.ne.s32.totalorder %s105, %s107
    %p114 = scmp.eq.s32.totalorder %s34, 1
    %p115 = por %p113, %p114
    %p116 = scmp.ne.s32.totalorder %s107, %s108
    %p117 = scmp.eq.s32.totalorder %s34, 0
    %p118 = por %p116, %p117
    %p119 = scmp.ne.s32.totalorder %s107, %s108
    %p120 = scmp.eq.s32.totalorder %s35, 1
    %p121 = por %p119, %p120
    %p123 = scmp.ne.s32.totalorder %s108, %s122
    %p124 = scmp.eq.s32.totalorder %s35, 0
    %p125 = por %p123, %p124
    %s127 = sadd.s32 %s126, 1
    %p130 = scmp.eq.s32.totalorder %s29, 1
    %p131 = scmp.ne.s32.totalorder %s126, %s128
    %p132 = scmp.eq.s32.totalorder %s29, 0
    %p133 = por %p131, %p132
    %p134 = scmp.ne.s32.totalorder %s126, %s128
    %p135 = scmp.eq.s32.totalorder %s34, 1
    %p136 = por %p134, %p135
    %p137 = scmp.ne.s32.totalorder %s128, %s129
    %p138 = scmp.eq.s32.totalorder %s34, 0
    %p139 = por %p137, %p138
    %p140 = scmp.ne.s32.totalorder %s128, %s129
    %p141 = scmp.eq.s32.totalorder %s35, 1
    %p142 = por %p140, %p141
    %p144 = scmp.ne.s32.totalorder %s129, %s143
    %p145 = scmp.eq.s32.totalorder %s35, 0
    %p146 = por %p144, %p145
    %s148 = sadd.s32 %s147, 1
    %p151 = scmp.eq.s32.totalorder %s29, 1
    %p152 = scmp.ne.s32.totalorder %s147, %s149
    %p153 = scmp.eq.s32.totalorder %s29, 0
    %p154 = por %p152, %p153
    %p155 = scmp.ne.s32.totalorder %s147, %s149
    %p156 = scmp.eq.s32.totalorder %s34, 1
    %p157 = por %p155, %p156
    %p158 = scmp.ne.s32.totalorder %s149, %s150
    %p159 = scmp.eq.s32.totalorder %s34, 0
    %p160 = por %p158, %p159
    %p161 = scmp.ne.s32.totalorder %s149, %s150
    %p162 = scmp.eq.s32.totalorder %s35, 1
    %p163 = por %p161, %p162
    %p165 = scmp.ne.s32.totalorder %s150, %s164
    %p166 = scmp.eq.s32.totalorder %s35, 0
    %p167 = por %p165, %p166
    %s169 = sadd.s32 %s168, 1
    %p172 = scmp.eq.s32.totalorder %s29, 1
    %p173 = scmp.ne.s32.totalorder %s168, %s170
    %p174 = scmp.eq.s32.totalorder %s29, 0
    %p175 = por %p173, %p174
    %p176 = scmp.ne.s32.totalorder %s168, %s170
    %p177 = scmp.eq.s32.totalorder %s34, 1
    %p178 = por %p176, %p177
    %p179 = scmp.ne.s32.totalorder %s170, %s171
    %p180 = scmp.eq.s32.totalorder %s34, 0
    %p181 = por %p179, %p180
    %p182 = scmp.ne.s32.totalorder %s170, %s171
    %p183 = scmp.eq.s32.totalorder %s35, 1
    %p184 = por %p182, %p183
    %p186 = scmp.ne.s32.totalorder %s171, %s185
    %p187 = scmp.eq.s32.totalorder %s35, 0
    %p188 = por %p186, %p187
    %s190 = sadd.s32 %s189, 1
    %p193 = scmp.eq.s32.totalorder %s29, 1
    %p194 = scmp.ne.s32.totalorder %s189, %s191
    %p195 = scmp.eq.s32.totalorder %s29, 0
    %p196 = por %p194, %p195
    %p197 = scmp.ne.s32.totalorder %s189, %s191
    %p198 = scmp.eq.s32.totalorder %s34, 1
    %p199 = por %p197, %p198
    %p200 = scmp.ne.s32.totalorder %s191, %s192
    %p201 = scmp.eq.s32.totalorder %s34, 0
    %p202 = por %p200, %p201
    %p203 = scmp.ne.s32.totalorder %s191, %s192
    %p204 = scmp.eq.s32.totalorder %s35, 1
    %p205 = por %p203, %p204
    %p207 = scmp.ne.s32.totalorder %s192, %s206
    %p208 = scmp.eq.s32.totalorder %s35, 0
    %p209 = por %p207, %p208
    %s211 = sadd.s32 %s210, 1
    %p214 = scmp.eq.s32.totalorder %s29, 1
    %p215 = scmp.ne.s32.totalorder %s210, %s212
    %p216 = scmp.eq.s32.totalorder %s29, 0
    %p217 = por %p215, %p216
    %p218 = scmp.ne.s32.totalorder %s210, %s212
    %p219 = scmp.eq.s32.totalorder %s34, 1
    %p220 = por %p218, %p219
    %p221 = scmp.ne.s32.totalorder %s212, %s213
    %p222 = scmp.eq.s32.totalorder %s34, 0
    %p223 = por %p221, %p222
    %p224 = scmp.ne.s32.totalorder %s212, %s213
    %p225 = scmp.eq.s32.totalorder %s35, 1
    %p226 = por %p224, %p225
    %p228 = scmp.ne.s32.totalorder %s213, %s227
    %p229 = scmp.eq.s32.totalorder %s35, 0
    %p230 = por %p228, %p229
    %s232 = sadd.s32 %s231, 1
    %p235 = scmp.eq.s32.totalorder %s29, 1
    %p236 = scmp.ne.s32.totalorder %s231, %s233
    %p237 = scmp.eq.s32.totalorder %s29, 0
    %p238 = por %p236, %p237
    %p239 = scmp.ne.s32.totalorder %s231, %s233
    %p240 = scmp.eq.s32.totalorder %s34, 1
    %p241 = por %p239, %p240
    %p242 = scmp.ne.s32.totalorder %s233, %s234
    %p243 = scmp.eq.s32.totalorder %s34, 0
    %p244 = por %p242, %p243
    %p245 = scmp.ne.s32.totalorder %s233, %s234
    %p246 = scmp.eq.s32.totalorder %s35, 1
    %p247 = por %p245, %p246
    %p249 = scmp.ne.s32.totalorder %s234, %s248
    %p250 = scmp.eq.s32.totalorder %s35, 0
    %p251 = por %p249, %p250
    %s253 = sadd.s32 %s252, 1
    %p256 = scmp.eq.s32.totalorder %s29, 1
    %p257 = scmp.ne.s32.totalorder %s252, %s254
    %p258 = scmp.eq.s32.totalorder %s29, 0
    %p259 = por %p257, %p258
    %p260 = scmp.ne.s32.totalorder %s252, %s254
    %p261 = scmp.eq.s32.totalorder %s34, 1
    %p262 = por %p260, %p261
    %p263 = scmp.ne.s32.totalorder %s254, %s255
    %p264 = scmp.eq.s32.totalorder %s34, 0
    %p265 = por %p263, %p264
    %p266 = scmp.ne.s32.totalorder %s254, %s255
    %p267 = scmp.eq.s32.totalorder %s35, 1
    %p268 = por %p266, %p267
    %p270 = scmp.ne.s32.totalorder %s255, %s269
    %p271 = scmp.eq.s32.totalorder %s35, 0
    %p272 = por %p270, %p271
    %s274 = sadd.s32 %s273, 1
    %p277 = scmp.eq.s32.totalorder %s29, 1
    %p278 = scmp.ne.s32.totalorder %s273, %s275
    %p279 = scmp.eq.s32.totalorder %s29, 0
    %p280 = por %p278, %p279
    %p281 = scmp.ne.s32.totalorder %s273, %s275
    %p282 = scmp.eq.s32.totalorder %s34, 1
    %p283 = por %p281, %p282
    %p284 = scmp.ne.s32.totalorder %s275, %s276
    %p285 = scmp.eq.s32.totalorder %s34, 0
    %p286 = por %p284, %p285
    %p287 = scmp.ne.s32.totalorder %s275, %s276
    %p288 = scmp.eq.s32.totalorder %s35, 1
    %p289 = por %p287, %p288
    %p291 = scmp.ne.s32.totalorder %s276, %s290
    %p292 = scmp.eq.s32.totalorder %s35, 0
    %p293 = por %p291, %p292
    %s295 = sadd.s32 %s294, 1
    %p298 = scmp.eq.s32.totalorder %s29, 1
    %p299 = scmp.ne.s32.totalorder %s294, %s296
    %p300 = scmp.eq.s32.totalorder %s29, 0
    %p301 = por %p299, %p300
    %p302 = scmp.ne.s32.totalorder %s294, %s296
    %p303 = scmp.eq.s32.totalorder %s34, 1
    %p304 = por %p302, %p303
    %p305 = scmp.ne.s32.totalorder %s296, %s297
    %p306 = scmp.eq.s32.totalorder %s34, 0
    %p307 = por %p305, %p306
    %p308 = scmp.ne.s32.totalorder %s296, %s297
    %p309 = scmp.eq.s32.totalorder %s35, 1
    %p310 = por %p308, %p309
    %p312 = scmp.ne.s32.totalorder %s297, %s311
    %p313 = scmp.eq.s32.totalorder %s35, 0
    %p314 = por %p312, %p313
    %s316 = sadd.s32 %s315, 1
    %p319 = scmp.eq.s32.totalorder %s29, 1
    %p320 = scmp.ne.s32.totalorder %s315, %s317
    %p321 = scmp.eq.s32.totalorder %s29, 0
    %p322 = por %p320, %p321
    %p323 = scmp.ne.s32.totalorder %s315, %s317
    %p324 = scmp.eq.s32.totalorder %s34, 1
    %p325 = por %p323, %p324
    %p326 = scmp.ne.s32.totalorder %s317, %s318
    %p327 = scmp.eq.s32.totalorder %s34, 0
    %p328 = por %p326, %p327
    %p329 = scmp.ne.s32.totalorder %s317, %s318
    %p330 = scmp.eq.s32.totalorder %s35, 1
    %p331 = por %p329, %p330
    %p333 = scmp.ne.s32.totalorder %s318, %s332
    %p334 = scmp.eq.s32.totalorder %s35, 0
    %p335 = por %p333, %p334
    %s337 = sadd.s32 %s336, 1
    %p340 = scmp.eq.s32.totalorder %s29, 1
    %p341 = scmp.ne.s32.totalorder %s336, %s338
    %p342 = scmp.eq.s32.totalorder %s29, 0
    %p343 = por %p341, %p342
    %p344 = scmp.ne.s32.totalorder %s336, %s338
    %p345 = scmp.eq.s32.totalorder %s34, 1
    %p346 = por %p344, %p345
    %p347 = scmp.ne.s32.totalorder %s338, %s339
    %p348 = scmp.eq.s32.totalorder %s34, 0
    %p349 = por %p347, %p348
    %p350 = scmp.ne.s32.totalorder %s338, %s339
    %p351 = scmp.eq.s32.totalorder %s35, 1
    %p352 = por %p350, %p351
    %p354 = scmp.ne.s32.totalorder %s339, %s353
    %p355 = scmp.eq.s32.totalorder %s35, 0
    %p356 = por %p354, %p355
    %s358 = sadd.s32 %s357, 1
    %p361 = scmp.eq.s32.totalorder %s29, 1
    %p362 = scmp.ne.s32.totalorder %s357, %s359
    %p363 = scmp.eq.s32.totalorder %s29, 0
    %p364 = por %p362, %p363
    %p365 = scmp.ne.s32.totalorder %s357, %s359
    %p366 = scmp.eq.s32.totalorder %s34, 1
    %p367 = por %p365, %p366
    %p368 = scmp.ne.s32.totalorder %s359, %s360
    %p369 = scmp.eq.s32.totalorder %s34, 0
    %p370 = por %p368, %p369
    %p371 = scmp.ne.s32.totalorder %s359, %s360
    %p372 = scmp.eq.s32.totalorder %s35, 1
    %p373 = por %p371, %p372
    %p375 = scmp.ne.s32.totalorder %s360, %s374
    %p376 = scmp.eq.s32.totalorder %s35, 0
    %p377 = por %p375, %p376
    %s379 = sadd.s32 %s378, 1
    %p382 = scmp.eq.s32.totalorder %s29, 1
    %p383 = scmp.ne.s32.totalorder %s378, %s380
    %p384 = scmp.eq.s32.totalorder %s29, 0
    %p385 = por %p383, %p384
    %p386 = scmp.ne.s32.totalorder %s378, %s380
    %p387 = scmp.eq.s32.totalorder %s34, 1
    %p388 = por %p386, %p387
    %p389 = scmp.ne.s32.totalorder %s380, %s381
    %p390 = scmp.eq.s32.totalorder %s34, 0
    %p391 = por %p389, %p390
    %p392 = scmp.ne.s32.totalorder %s380, %s381
    %p393 = scmp.eq.s32.totalorder %s35, 1
    %p394 = por %p392, %p393
    %p396 = scmp.ne.s32.totalorder %s381, %s395
    %p397 = scmp.eq.s32.totalorder %s35, 0
    %p398 = por %p396, %p397
    %s400 = sadd.s32 %s399, 1
    %p403 = scmp.eq.s32.totalorder %s29, 1
    %p404 = scmp.ne.s32.totalorder %s399, %s401
    %p405 = scmp.eq.s32.totalorder %s29, 0
    %p406 = por %p404, %p405
    %p407 = scmp.ne.s32.totalorder %s399, %s401
    %p408 = scmp.eq.s32.totalorder %s34, 1
    %p409 = por %p407, %p408
    %p410 = scmp.ne.s32.totalorder %s401, %s402
    %p411 = scmp.eq.s32.totalorder %s34, 0
    %p412 = por %p410, %p411
    %p413 = scmp.ne.s32.totalorder %s401, %s402
    %p414 = scmp.eq.s32.totalorder %s35, 1
    %p415 = por %p413, %p414
    %p417 = scmp.ne.s32.totalorder %s402, %s416
    %p418 = scmp.eq.s32.totalorder %s35, 0
    %p419 = por %p417, %p418
    %s421 = sadd.s32 %s420, 1
    %p424 = scmp.eq.s32.totalorder %s29, 1
    %p425 = scmp.ne.s32.totalorder %s420, %s422
    %p426 = scmp.eq.s32.totalorder %s29, 0
    %p427 = por %p425, %p426
    %p428 = scmp.ne.s32.totalorder %s420, %s422
    %p429 = scmp.eq.s32.totalorder %s34, 1
    %p430 = por %p428, %p429
    %p431 = scmp.ne.s32.totalorder %s422, %s423
    %p432 = scmp.eq.s32.totalorder %s34, 0
    %p433 = por %p431, %p432
    %p434 = scmp.ne.s32.totalorder %s422, %s423
    %p435 = scmp.eq.s32.totalorder %s35, 1
    %p436 = por %p434, %p435
    %p438 = scmp.ne.s32.totalorder %s423, %s437
    %p439 = scmp.eq.s32.totalorder %s35, 0
    %p440 = por %p438, %p439
    %s442 = sadd.s32 %s441, 1
    %p445 = scmp.eq.s32.totalorder %s29, 1
    %p446 = scmp.ne.s32.totalorder %s441, %s443
    %p447 = scmp.eq.s32.totalorder %s29, 0
    %p448 = por %p446, %p447
    %p449 = scmp.ne.s32.totalorder %s441, %s443
    %p450 = scmp.eq.s32.totalorder %s34, 1
    %p451 = por %p449, %p450
    %p452 = scmp.ne.s32.totalorder %s443, %s444
    %p453 = scmp.eq.s32.totalorder %s34, 0
    %p454 = por %p452, %p453
    %p455 = scmp.ne.s32.totalorder %s443, %s444
    %p456 = scmp.eq.s32.totalorder %s35, 1
    %p457 = por %p455, %p456
    %p459 = scmp.ne.s32.totalorder %s444, %s458
    %p460 = scmp.eq.s32.totalorder %s35, 0
    %p461 = por %p459, %p460
    %s463 = sadd.s32 %s462, 1
    %p466 = scmp.eq.s32.totalorder %s29, 1
    %p467 = scmp.ne.s32.totalorder %s462, %s464
    %p468 = scmp.eq.s32.totalorder %s29, 0
    %p469 = por %p467, %p468
    %p470 = scmp.ne.s32.totalorder %s462, %s464
    %p471 = scmp.eq.s32.totalorder %s34, 1
    %p472 = por %p470, %p471
    %p473 = scmp.ne.s32.totalorder %s464, %s465
    %p474 = scmp.eq.s32.totalorder %s34, 0
    %p475 = por %p473, %p474
    %p476 = scmp.ne.s32.totalorder %s464, %s465
    %p477 = scmp.eq.s32.totalorder %s35, 1
    %p478 = por %p476, %p477
    %p480 = scmp.ne.s32.totalorder %s465, %s479
    %p481 = scmp.eq.s32.totalorder %s35, 0
    %p482 = por %p480, %p481
    %s484 = sadd.s32 %s483, 1
    %p487 = scmp.eq.s32.totalorder %s29, 1
    %p488 = scmp.ne.s32.totalorder %s483, %s485
    %p489 = scmp.eq.s32.totalorder %s29, 0
    %p490 = por %p488, %p489
    %p491 = scmp.ne.s32.totalorder %s483, %s485
    %p492 = scmp.eq.s32.totalorder %s34, 1
    %p493 = por %p491, %p492
    %p494 = scmp.ne.s32.totalorder %s485, %s486
    %p495 = scmp.eq.s32.totalorder %s34, 0
    %p496 = por %p494, %p495
    %p497 = scmp.ne.s32.totalorder %s485, %s486
    %p498 = scmp.eq.s32.totalorder %s35, 1
    %p499 = por %p497, %p498
    %p501 = scmp.ne.s32.totalorder %s486, %s500
    %p502 = scmp.eq.s32.totalorder %s35, 0
    %p503 = por %p501, %p502
    %s505 = sadd.s32 %s504, 1
    %p508 = scmp.eq.s32.totalorder %s29, 1
    %p509 = scmp.ne.s32.totalorder %s504, %s506
    %p510 = scmp.eq.s32.totalorder %s29, 0
    %p511 = por %p509, %p510
    %p512 = scmp.ne.s32.totalorder %s504, %s506
    %p513 = scmp.eq.s32.totalorder %s34, 1
    %p514 = por %p512, %p513
    %p515 = scmp.ne.s32.totalorder %s506, %s507
    %p516 = scmp.eq.s32.totalorder %s34, 0
    %p517 = por %p515, %p516
    %p518 = scmp.ne.s32.totalorder %s506, %s507
    %p519 = scmp.eq.s32.totalorder %s35, 1
    %p520 = por %p518, %p519
    %p522 = scmp.ne.s32.totalorder %s507, %s521
    %p523 = scmp.eq.s32.totalorder %s35, 0
    %p524 = por %p522, %p523
    %s525 = ssub.s32 %s29, %s36
    %p526 = scmp.eq.s32.totalorder %s525, 0
    %s528 = sadd.s32 %s527, 1
    %s529 = scalar_select %p526, %s527, %s528
    %p532 = pneg %p526
    %p533 = scmp.eq.s32.totalorder %s29, 1
    %p534 = por %p532, %p533
    %p535 = scmp.ne.s32.totalorder %s527, %s530
    %p536 = scmp.eq.s32.totalorder %s29, 0
    %p537 = por %p535, %p536
    %p538 = scmp.ne.s32.totalorder %s527, %s530
    %p539 = scmp.eq.s32.totalorder %s34, 1
    %p540 = por %p538, %p539
    %p541 = scmp.ne.s32.totalorder %s530, %s531
    %p542 = scmp.eq.s32.totalorder %s34, 0
    %p543 = por %p541, %p542
    %p544 = scmp.ne.s32.totalorder %s530, %s531
    %p545 = scmp.eq.s32.totalorder %s35, 1
    %p546 = por %p544, %p545
    %p548 = scmp.ne.s32.totalorder %s531, %s547
    %p549 = scmp.eq.s32.totalorder %s35, 0
    %p550 = por %p548, %p549
    %p551 = scmp.le.s32.totalorder 1, %s29
    %p552 = scmp.lt.s32.totalorder %s29, 3
    %p553 = pnand %p551, %p552
    %p554 = pneg %p553
    // Predicated region
    $region9: #{clip_finetuner_forward.1} parent=5 // pred_check
      _
    $region10: #{clip_finetuner_forward.1} parent=5 // pred_check_branch
      %556 = sbr.rel (%p553) target = $region12
    $region11: #{clip_finetuner_forward.1} parent=5 // pred_region
      %s557 = ssub.s32 %s29, 1
      // Predicated region
      $region13: #{clip_finetuner_forward.1} parent=11 // pred_check
        %p558 = pneg %p76
      $region14: #{clip_finetuner_forward.1} parent=11 // pred_check_branch
        %560 = sbr.rel (%p558) target = $region16
      $region15: #{clip_finetuner_forward.1} parent=11 // pred_region
        _
      $region16: #{clip_finetuner_forward.1} parent=11 // pred_fallthru
        _
      // Predicated region
      $region17: #{clip_finetuner_forward.1} parent=11 // pred_check
        %p561 = pneg %p97
      $region18: #{clip_finetuner_forward.1} parent=11 // pred_check_branch
        %563 = sbr.rel (%p561) target = $region20
      $region19: #{clip_finetuner_forward.1} parent=11 // pred_region
        _
      $region20: #{clip_finetuner_forward.1} parent=11 // pred_fallthru
        _
      // Predicated region
      $region21: #{clip_finetuner_forward.1} parent=11 // pred_check
        %p564 = pneg %p118
      $region22: #{clip_finetuner_forward.1} parent=11 // pred_check_branch
        %566 = sbr.rel (%p564) target = $region24
      $region23: #{clip_finetuner_forward.1} parent=11 // pred_region
        _
      $region24: #{clip_finetuner_forward.1} parent=11 // pred_fallthru
        _
      // Predicated region
      $region25: #{clip_finetuner_forward.1} parent=11 // pred_check
        %p567 = pneg %p139
      $region26: #{clip_finetuner_forward.1} parent=11 // pred_check_branch
        %569 = sbr.rel (%p567) target = $region28
      $region27: #{clip_finetuner_forward.1} parent=11 // pred_region
        _
      $region28: #{clip_finetuner_forward.1} parent=11 // pred_fallthru
        _
      // Predicated region
      $region29: #{clip_finetuner_forward.1} parent=11 // pred_check
        %p570 = pneg %p160
      $region30: #{clip_finetuner_forward.1} parent=11 // pred_check_branch
        %572 = sbr.rel (%p570) target = $region32
      $region31: #{clip_finetuner_forward.1} parent=11 // pred_region
        _
      $region32: #{clip_finetuner_forward.1} parent=11 // pred_fallthru
        _
      // Predicated region
      $region33: #{clip_finetuner_forward.1} parent=11 // pred_check
        %p573 = pneg %p181
      $region34: #{clip_finetuner_forward.1} parent=11 // pred_check_branch
        %575 = sbr.rel (%p573) target = $region36
      $region35: #{clip_finetuner_forward.1} parent=11 // pred_region
        _
      $region36: #{clip_finetuner_forward.1} parent=11 // pred_fallthru
        _
      // Predicated region
      $region37: #{clip_finetuner_forward.1} parent=11 // pred_check
        %p576 = pneg %p202
      $region38: #{clip_finetuner_forward.1} parent=11 // pred_check_branch
        %578 = sbr.rel (%p576) target = $region40
      $region39: #{clip_finetuner_forward.1} parent=11 // pred_region
        _
      $region40: #{clip_finetuner_forward.1} parent=11 // pred_fallthru
        _
      // Predicated region
      $region41: #{clip_finetuner_forward.1} parent=11 // pred_check
        %p579 = pneg %p223
      $region42: #{clip_finetuner_forward.1} parent=11 // pred_check_branch
        %581 = sbr.rel (%p579) target = $region44
      $region43: #{clip_finetuner_forward.1} parent=11 // pred_region
        _
      $region44: #{clip_finetuner_forward.1} parent=11 // pred_fallthru
        _
      // Predicated region
      $region45: #{clip_finetuner_forward.1} parent=11 // pred_check
        %p582 = pneg %p244
      $region46: #{clip_finetuner_forward.1} parent=11 // pred_check_branch
        %584 = sbr.rel (%p582) target = $region48
      $region47: #{clip_finetuner_forward.1} parent=11 // pred_region
        _
      $region48: #{clip_finetuner_forward.1} parent=11 // pred_fallthru
        _
      // Predicated region
      $region49: #{clip_finetuner_forward.1} parent=11 // pred_check
        %p585 = pneg %p265
      $region50: #{clip_finetuner_forward.1} parent=11 // pred_check_branch
        %587 = sbr.rel (%p585) target = $region52
      $region51: #{clip_finetuner_forward.1} parent=11 // pred_region
        _
      $region52: #{clip_finetuner_forward.1} parent=11 // pred_fallthru
        _
      // Predicated region
      $region53: #{clip_finetuner_forward.1} parent=11 // pred_check
        %p588 = pneg %p286
      $region54: #{clip_finetuner_forward.1} parent=11 // pred_check_branch
        %590 = sbr.rel (%p588) target = $region56
      $region55: #{clip_finetuner_forward.1} parent=11 // pred_region
        _
      $region56: #{clip_finetuner_forward.1} parent=11 // pred_fallthru
        _
      // Predicated region
      $region57: #{clip_finetuner_forward.1} parent=11 // pred_check
        %p591 = pneg %p307
      $region58: #{clip_finetuner_forward.1} parent=11 // pred_check_branch
        %593 = sbr.rel (%p591) target = $region60
      $region59: #{clip_finetuner_forward.1} parent=11 // pred_region
        _
      $region60: #{clip_finetuner_forward.1} parent=11 // pred_fallthru
        _
      // Predicated region
      $region61: #{clip_finetuner_forward.1} parent=11 // pred_check
        %p594 = pneg %p328
      $region62: #{clip_finetuner_forward.1} parent=11 // pred_check_branch
        %596 = sbr.rel (%p594) target = $region64
      $region63: #{clip_finetuner_forward.1} parent=11 // pred_region
        _
      $region64: #{clip_finetuner_forward.1} parent=11 // pred_fallthru
        _
      // Predicated region
      $region65: #{clip_finetuner_forward.1} parent=11 // pred_check
        %p597 = pneg %p349
      $region66: #{clip_finetuner_forward.1} parent=11 // pred_check_branch
        %599 = sbr.rel (%p597) target = $region68
      $region67: #{clip_finetuner_forward.1} parent=11 // pred_region
        _
      $region68: #{clip_finetuner_forward.1} parent=11 // pred_fallthru
        _
      // Predicated region
      $region69: #{clip_finetuner_forward.1} parent=11 // pred_check
        %p600 = pneg %p370
      $region70: #{clip_finetuner_forward.1} parent=11 // pred_check_branch
        %602 = sbr.rel (%p600) target = $region72
      $region71: #{clip_finetuner_forward.1} parent=11 // pred_region
        _
      $region72: #{clip_finetuner_forward.1} parent=11 // pred_fallthru
        _
      // Predicated region
      $region73: #{clip_finetuner_forward.1} parent=11 // pred_check
        %p603 = pneg %p391
      $region74: #{clip_finetuner_forward.1} parent=11 // pred_check_branch
        %605 = sbr.rel (%p603) target = $region76
      $region75: #{clip_finetuner_forward.1} parent=11 // pred_region
        _
      $region76: #{clip_finetuner_forward.1} parent=11 // pred_fallthru
        _
      // Predicated region
      $region77: #{clip_finetuner_forward.1} parent=11 // pred_check
        %p606 = pneg %p412
      $region78: #{clip_finetuner_forward.1} parent=11 // pred_check_branch
        %608 = sbr.rel (%p606) target = $region80
      $region79: #{clip_finetuner_forward.1} parent=11 // pred_region
        _
      $region80: #{clip_finetuner_forward.1} parent=11 // pred_fallthru
        _
      // Predicated region
      $region81: #{clip_finetuner_forward.1} parent=11 // pred_check
        %p609 = pneg %p433
      $region82: #{clip_finetuner_forward.1} parent=11 // pred_check_branch
        %611 = sbr.rel (%p609) target = $region84
      $region83: #{clip_finetuner_forward.1} parent=11 // pred_region
        _
      $region84: #{clip_finetuner_forward.1} parent=11 // pred_fallthru
        _
      // Predicated region
      $region85: #{clip_finetuner_forward.1} parent=11 // pred_check
        %p612 = pneg %p454
      $region86: #{clip_finetuner_forward.1} parent=11 // pred_check_branch
        %614 = sbr.rel (%p612) target = $region88
      $region87: #{clip_finetuner_forward.1} parent=11 // pred_region
        _
      $region88: #{clip_finetuner_forward.1} parent=11 // pred_fallthru
        _
      // Predicated region
      $region89: #{clip_finetuner_forward.1} parent=11 // pred_check
        %p615 = pneg %p475
      $region90: #{clip_finetuner_forward.1} parent=11 // pred_check_branch
        %617 = sbr.rel (%p615) target = $region92
      $region91: #{clip_finetuner_forward.1} parent=11 // pred_region
        _
      $region92: #{clip_finetuner_forward.1} parent=11 // pred_fallthru
        _
      // Predicated region
      $region93: #{clip_finetuner_forward.1} parent=11 // pred_check
        %p618 = pneg %p496
      $region94: #{clip_finetuner_forward.1} parent=11 // pred_check_branch
        %620 = sbr.rel (%p618) target = $region96
      $region95: #{clip_finetuner_forward.1} parent=11 // pred_region
        _
      $region96: #{clip_finetuner_forward.1} parent=11 // pred_fallthru
        _
      // Predicated region
      $region97: #{clip_finetuner_forward.1} parent=11 // pred_check
        %p621 = pneg %p517
      $region98: #{clip_finetuner_forward.1} parent=11 // pred_check_branch
        %623 = sbr.rel (%p621) target = $region100
      $region99: #{clip_finetuner_forward.1} parent=11 // pred_region
        _
      $region100: #{clip_finetuner_forward.1} parent=11 // pred_fallthru
        _
    $region12: #{clip_finetuner_forward.1} parent=5 // pred_fallthru
      _
    %p624 = scmp.lt.s32.totalorder %s29, 2
    // Predicated region
    $region101: #{clip_finetuner_forward.1} parent=5 // pred_check
      %p625 = pneg %p624
    $region102: #{clip_finetuner_forward.1} parent=5 // pred_check_branch
      %627 = sbr.rel (%p625) target = $region104
    $region103: #{clip_finetuner_forward.1} parent=5 // pred_region
      // Predicated region
      $region105: #{clip_finetuner_forward.1} parent=103 // pred_check
        %p628 = pneg %p49
      $region106: #{clip_finetuner_forward.1} parent=103 // pred_check_branch
        %630 = sbr.rel (%p628) target = $region108
      $region107: #{clip_finetuner_forward.1} parent=103 // pred_region
        %p631 = scmp.lt.s32.totalorder %s29, 1
        %s632 = scalar_select %p631, %s29, 1
        %s633 = smul.addr %s632, 2
        %s634 = smul.addr %s633, 4
        %s635 = scalar_lea.vmem %s0, %s634
      $region108: #{clip_finetuner_forward.1} parent=103 // pred_fallthru
        _
    $region104: #{clip_finetuner_forward.1} parent=5 // pred_fallthru
      _
    %p636 = scmp.le.s32.totalorder 1, %s29
    %p637 = scmp.lt.s32.totalorder %s29, 3
    %p638 = pnand %p636, %p637
    %p639 = pneg %p638
    // Predicated region
    $region109: #{clip_finetuner_forward.1} parent=5 // pred_check
      _
    $region110: #{clip_finetuner_forward.1} parent=5 // pred_check_branch
      %641 = sbr.rel (%p638) target = $region112
    $region111: #{clip_finetuner_forward.1} parent=5 // pred_region
      %s642 = ssub.s32 %s29, 1
      %p643 = scmp.lt.s32.totalorder %s34, 1
      %s644 = scalar_select %p643, %s34, 1
      %s645 = smul.addr %s644, 2
      %s646 = smul.addr %s645, 4
      %s647 = scalar_lea.vmem %s0, %s646
      %p648 = pneg %p55
      %p649 = pneg %p52
      %p650 = pneg %p76
      %p651 = pneg %p73
      %p652 = pneg %p97
      %p653 = pneg %p94
      %p654 = pneg %p118
      %p655 = pneg %p115
      %p656 = pneg %p139
      %p657 = pneg %p136
      %p658 = pneg %p160
      %p659 = pneg %p157
      %p660 = pneg %p181
      %p661 = pneg %p178
      %p662 = pneg %p202
      %p663 = pneg %p199
      %p664 = pneg %p223
      %p665 = pneg %p220
      %p666 = pneg %p244
      %p667 = pneg %p241
      %p668 = pneg %p265
      %p669 = pneg %p262
      %p670 = pneg %p286
      %p671 = pneg %p283
      %p672 = pneg %p307
      %p673 = pneg %p304
      %p674 = pneg %p328
      %p675 = pneg %p325
      %p676 = pneg %p349
      %p677 = pneg %p346
      %p678 = pneg %p370
      %p679 = pneg %p367
      %p680 = pneg %p391
      %p681 = pneg %p388
      %p682 = pneg %p412
      %p683 = pneg %p409
      %p684 = pneg %p433
      %p685 = pneg %p430
      %p686 = pneg %p454
      %p687 = pneg %p451
      %p688 = pneg %p475
      %p689 = pneg %p472
      %p690 = pneg %p496
      %p691 = pneg %p493
      %p692 = pneg %p517
      %p693 = pneg %p514
      %p694 = pneg %p543
      %p695 = pneg %p540
      %p696 = scmp.lt.s32.totalorder %s34, 1
      %s697 = scalar_select %p696, %s34, 1
      %s698 = smul.addr %s697, 8
      %s699 = scalar_lea.vmem %s23, %s698
      %p700 = scmp.lt.s32.totalorder %s34, 1
      %s701 = scalar_select %p700, %s34, 1
      %s702 = smul.addr %s701, 2
      %s703 = smul.addr %s702, 4
      %s704 = scalar_lea.vmem %s0, %s703
      %p705 = scmp.lt.s32.totalorder %s34, 1
      %s706 = scalar_select %p705, %s34, 1
      %s707 = smul.addr %s706, 8
      %s708 = scalar_lea.vmem %s23, %s707
      %v710 = vld [vmem:[%s704] sm:$0xff]
      %v711 = vld [vmem:[%s1] sm:$0xff]
      %v712 = vld [vmem:[%s1 + $0x8] sm:$0xff]
      %v713 = vld [vmem:[%s1 + $0x10] sm:$0xff]
      %v714 = vld [vmem:[%s1 + $0x18] sm:$0xff]
      %v715 = vld [vmem:[%s1 + $0x20] sm:$0xff]
      %v716 = vld [vmem:[%s1 + $0x28] sm:$0xff]
      %v717 = vld [vmem:[%s1 + $0x30] sm:$0xff]
      %v718 = vld [vmem:[%s1 + $0x38] sm:$0xff]
      %v719 = vld [vmem:[%s1 + $0x40] sm:$0xff]
      %v720 = vld [vmem:[%s1 + $0x48] sm:$0xff]
      %v721 = vld [vmem:[%s1 + $0x50] sm:$0xff]
      %v722 = vld [vmem:[%s1 + $0x58] sm:$0xff]
      %v723 = vld [vmem:[%s1 + $0x60] sm:$0xff]
      %v724 = vld [vmem:[%s1 + $0x68] sm:$0xff]
      %v725 = vld [vmem:[%s1 + $0x70] sm:$0xff]
      %v726 = vld [vmem:[%s1 + $0x78] sm:$0xff]
      %v727 = vld [vmem:[%s1 + $0x80] sm:$0xff]
      %v728 = vld [vmem:[%s1 + $0x88] sm:$0xff]
      %v729 = vld [vmem:[%s1 + $0x90] sm:$0xff]
      %v730 = vld [vmem:[%s1 + $0x98] sm:$0xff]
      %v731 = vld [vmem:[%s1 + $0xa0] sm:$0xff]
      %v732 = vld [vmem:[%s1 + $0xa8] sm:$0xff]
      %v733 = vld [vmem:[%s1 + $0xb0] sm:$0xff]
      %v734 = vld [vmem:[%s1 + $0xb8] sm:$0xff]
      %736 = vst [vmem:[#allocation1] ss:$2 sm:$0xff] %v710
      %v737 = vld.sshfl [vmem:[#allocation1] sm:$0xff pattern:$0x75316420]
      %v738 = vld.sshfl [vmem:[#allocation1 + $0x8] sm:$0xff pattern:$0x75316420]
      %v741 = vpack.c.bf16 %v737, %v737
      %v742 = vpack.c.bf16 %v738, %v738
      %v743 = vpack.c.bf16 %v712, %v711
      %v744 = vpack.c.bf16 %v714, %v713
      %v745 = vpack.c.bf16 %v716, %v715
      %v746 = vpack.c.bf16 %v718, %v717
      %v747 = vpack.c.bf16 %v720, %v719
      %v748 = vpack.c.bf16 %v722, %v721
      %v749 = vpack.c.bf16 %v724, %v723
      %v750 = vpack.c.bf16 %v726, %v725
      %v751 = vpack.c.bf16 %v728, %v727
      %v752 = vpack.c.bf16 %v730, %v729
      %v753 = vpack.c.bf16 %v732, %v731
      %v754 = vpack.c.bf16 %v734, %v733
      %vm755 = vcmask 523264
      %v757 = vsel %vm755, %v742, 0
      %759 = vmatpush.bf16.msra.mxu0 %v750
      %760 = vmatpush.bf16.msra.mxu0 %v749
      %761 = vmatpush.bf16.msra.mxu0 %v748
      %762 = vmatpush.bf16.msra.mxu0 %v747
      %763 = vmatpush.bf16.msra.mxu0 %v746
      %764 = vmatpush.bf16.msra.mxu0 %v745
      %765 = vmatpush.bf16.msra.mxu0 %v744
      %766 = vmatpush.bf16.msra.mxu0 %v743
      %767 = vmatmul.bf16.gmra.mxu0 %v741
      %v768 = vpop.f32.mrf.mxu0
      %v769 = vadd.f32 0.0, %v768
      %v770 = vpop.f32.mrf.mxu0
      %771 = vdwg.mxu0
      %772 = vmatpush.bf16.msra.mxu0 0
      %773 = vmatpush.bf16.msra.mxu0 0
      %774 = vmatpush.bf16.msra.mxu0 0
      %775 = vmatpush.bf16.msra.mxu0 0
      %776 = vmatpush.bf16.msra.mxu0 %v754
      %777 = vmatpush.bf16.msra.mxu0 %v753
      %778 = vmatpush.bf16.msra.mxu0 %v752
      %779 = vmatpush.bf16.msra.mxu0 %v751
      %780 = vmatmul.bf16.gmra.mxu0 %v757
      %v781 = vpop.f32.mrf.mxu0
      %v782 = vadd.f32 %v769, %v781
      %v783 = vpop.f32.mrf.mxu0
      %784 = vdwg.mxu0
      %v785 = vld [vmem:[%s2] sm:$0x1]
      %v787 = vrot.slane %v782, 7
      %vm789 = vcmask 1040384
      %v790 = vsel %vm789, %v785, %v787
      %v791 = vld [vmem:[%s3] sm:$0x1f]
      %v792 = vadd.f32 %v790, %v791
      %v793 = vld [vmem:[%s4] sm:$0x1]
      %v794 = vld [vmem:[%s5] sm:$0x1]
      %vm795 = vcmask 258048
      %v796 = vsel %vm795, %v792, 0.0
      %797 = vadd.xlane.f32.xlu0 %v796
      %v798 = vpop.xlane.xlu0 %797
      %v799 = vrcp.pop 32.0
      %v800 = vmul.f32 32.0, %v799
      %v801 = vsub.f32 1.0, %v800
      %v802 = vmul.f32 %v799, %v801
      %v803 = vadd.f32 %v799, %v802
      %vm804 = vweird.f32 %v799
      %v805 = vsel %vm804, %v799, %v803
      %v806 = vmul.f32 %v798, %v805
      %v807 = vsub.f32 %v792, %v806
      %v808 = vmul.f32 %v807, %v807
      %v809 = vsel %vm795, %v808, 0.0
      %810 = vadd.xlane.f32.xlu0 %v809
      %v811 = vpop.xlane.xlu0 %810
      %v812 = vmul.f32 %v811, %v805
      %v813 = vadd.f32 %v812, 1e-05
      %v814 = vrsqrt.pop %v813
      %v815 = vmul.f32 %v814, %v813
      %v816 = vmul.f32 %v815, %v814
      %v817 = vmul.f32 0.5, %v816
      %v818 = vsub.f32 1.5, %v817
      %v819 = vmul.f32 %v814, %v818
      %vm820 = vweird.f32 %v813
      %vm821 = vweird.f32 %v814
      %vm822 = vmor %vm820, %vm821
      %v823 = vsel %vm822, %v814, %v819
      %v824 = vmul.f32 %v807, %v823
      %v826 = vperm.slane %v793, 0
      %v828 = vmul.f32 %v824, %v826
      %v830 = vperm.slane %v794, 0
      %v832 = vadd.f32 %v828, %v830
      %v833 = vld [vmem:[%s6] sm:$0x1]
      %v834 = vld [vmem:[%s7] sm:$0x1]
      %v835 = vsel %vm795, %v832, 0.0
      %836 = vadd.xlane.f32.xlu0 %v835
      %v837 = vpop.xlane.xlu0 %836
      %v838 = vmul.f32 %v837, %v805
      %v839 = vsub.f32 %v832, %v838
      %v840 = vmul.f32 %v839, %v839
      %v841 = vsel %vm795, %v840, 0.0
      %842 = vadd.xlane.f32.xlu0 %v841
      %v843 = vpop.xlane.xlu0 %842
      %v844 = vmul.f32 %v843, %v805
      %v845 = vadd.f32 %v844, 1e-05
      %v846 = vrsqrt.pop %v845
      %v847 = vmul.f32 %v846, %v845
      %v848 = vmul.f32 %v847, %v846
      %v849 = vmul.f32 0.5, %v848
      %v850 = vsub.f32 1.5, %v849
      %v851 = vmul.f32 %v846, %v850
      %vm852 = vweird.f32 %v845
      %vm853 = vweird.f32 %v846
      %vm854 = vmor %vm852, %vm853
      %v855 = vsel %vm854, %v846, %v851
      %v856 = vmul.f32 %v839, %v855
      %v858 = vperm.slane %v833, 0
      %v860 = vmul.f32 %v856, %v858
      %v862 = vperm.slane %v834, 0
      %v864 = vadd.f32 %v860, %v862
      %v865 = vld [vmem:[%s8] sm:$0xff]
      %v866 = vld [vmem:[%s8 + $0x8] sm:$0xff]
      %v867 = vld [vmem:[%s8 + $0x10] sm:$0xff]
      %v868 = vld [vmem:[%s8 + $0x18] sm:$0xff]
      %v869 = vpack.c.bf16 %v864, %v864
      %v870 = vpack.c.bf16 %v866, %v865
      %v871 = vpack.c.bf16 %v868, %v867
      %v872 = vld [vmem:[%s9] sm:$0x1]
      %v874 = vperm.slane %v872, 0
      %vm876 = vcmask 261120
      %v878 = vsel %vm876, %v869, 0
      %880 = vmatpush.bf16.msra.mxu0 0
      %881 = vmatpush.bf16.msra.mxu0 0
      %882 = vmatpush.bf16.msra.mxu0 0
      %883 = vmatpush.bf16.msra.mxu0 0
      %884 = vmatpush.bf16.msra.mxu0 0
      %885 = vmatpush.bf16.msra.mxu0 0
      %886 = vmatpush.bf16.msra.mxu0 %v871
      %887 = vmatpush.bf16.msra.mxu0 %v870
      %888 = vmatmul.bf16.gmra.mxu0 %v878
      %v889 = vpop.f32.mrf.mxu0
      %v890 = vadd.f32 %v874, %v889
      %v891 = vpop.f32.mrf.mxu0
      %892 = vdwg.mxu0
      %v893 = vmul.f32 %v890, 0.25
      %v894 = vpack.c.bf16 %v893, %v893
      %v895 = vpack.c.bf16 %v890, %v890
      %897 = vrot.lane.b32.xlu0 %v895, 96
      %v898 = vpop.permute.xlu0 %897
      %vm899 = vcmask 130048
      %v901 = vsel %vm899, %v894, 0
      %v904 = vsel %vm899, %v898, 0
      %906 = vmatpush.bf16.xpose.msra.mxu0 0
      %907 = vmatpush.bf16.xpose.msra.mxu0 0
      %908 = vmatpush.bf16.xpose.msra.mxu0 0
      %909 = vmatpush.bf16.xpose.msra.mxu0 0
      %910 = vmatpush.bf16.xpose.msra.mxu0 0
      %911 = vmatpush.bf16.xpose.msra.mxu0 0
      %912 = vmatpush.bf16.xpose.msra.mxu0 0
      %913 = vmatpush.bf16.xpose.msra.mxu0 %v904
      %914 = vmatmul.bf16.gmra.mxu0 %v901
      %v915 = vpop.f32.mrf.mxu0
      %v916 = vadd.f32 0.0, %v915
      %v917 = vpop.f32.mrf.mxu0
      %918 = vdwg.mxu0
      %vm919 = vcmask 36864
      %v920 = vsel %vm919, %v916, -inf
      %921 = vmax.xlane.f32.xlu0 %v920
      %v922 = vpop.xlane.xlu0 %921
      %v923 = vsub.f32 %v916, %v922
      %v924 = vmul.f32 %v923, 1.442695
      %v925 = vpow.pop %v924
      %v926 = vsel %vm919, %v925, 0.0
      %927 = vadd.xlane.f32.xlu0 %v926
      %v928 = vpop.xlane.xlu0 %927
      %v929 = vrcp.pop %v928
      %v930 = vmul.f32 %v925, %v929
      %v931 = vpack.c.bf16 %v930, %v930
      %932 = vrot.lane.b32.xlu0 %v895, 64
      %v933 = vpop.permute.xlu0 %932
      %vm934 = vcmask 39936
      %v936 = vsel %vm934, %v931, 0
      %vm938 = vcmask 1041408
      %vm939 = vcmask 1042432
      %v940 = vsel %vm938, 4294967295, 65535
      %v941 = vsel %vm939, %v940, 0
      %v943 = vand.u32 %v933, %v941
      %945 = vmatpush.bf16.msra.mxu0 0
      %946 = vmatpush.bf16.msra.mxu0 0
      %947 = vmatpush.bf16.msra.mxu0 0
      %948 = vmatpush.bf16.msra.mxu0 0
      %949 = vmatpush.bf16.msra.mxu0 0
      %950 = vmatpush.bf16.msra.mxu0 0
      %951 = vmatpush.bf16.msra.mxu0 0
      %952 = vmatpush.bf16.msra.mxu0 %v943
      %953 = vmatmul.bf16.gmra.mxu0 %v936
      %v954 = vpop.f32.mrf.mxu0
      %v955 = vadd.f32 0.0, %v954
      %v956 = vpop.f32.mrf.mxu0
      %957 = vdwg.mxu0
      %959 = vrot.lane.b32.xlu0 %v894, 112
      %v960 = vpop.permute.xlu0 %959
      %961 = vrot.lane.b32.xlu0 %v895, 80
      %v962 = vpop.permute.xlu0 %961
      %v964 = vsel %vm899, %v960, 0
      %v967 = vsel %vm899, %v962, 0
      %969 = vmatpush.bf16.xpose.msra.mxu0 0
      %970 = vmatpush.bf16.xpose.msra.mxu0 0
      %971 = vmatpush.bf16.xpose.msra.mxu0 0
      %972 = vmatpush.bf16.xpose.msra.mxu0 0
      %973 = vmatpush.bf16.xpose.msra.mxu0 0
      %974 = vmatpush.bf16.xpose.msra.mxu0 0
      %975 = vmatpush.bf16.xpose.msra.mxu0 0
      %976 = vmatpush.bf16.xpose.msra.mxu0 %v967
      %977 = vmatmul.bf16.gmra.mxu0 %v964
      %v978 = vpop.f32.mrf.mxu0
      %v979 = vadd.f32 0.0, %v978
      %v980 = vpop.f32.mrf.mxu0
      %981 = vdwg.mxu0
      %v982 = vsel %vm919, %v979, -inf
      %983 = vmax.xlane.f32.xlu0 %v982
      %v984 = vpop.xlane.xlu0 %983
      %v985 = vsub.f32 %v979, %v984
      %v986 = vmul.f32 %v985, 1.442695
      %v987 = vpow.pop %v986
      %v988 = vsel %vm919, %v987, 0.0
      %989 = vadd.xlane.f32.xlu0 %v988
      %v990 = vpop.xlane.xlu0 %989
      %v991 = vrcp.pop %v990
      %v992 = vmul.f32 %v987, %v991
      %v993 = vpack.c.bf16 %v992, %v992
      %994 = vrot.lane.b32.xlu0 %v895, 48
      %v995 = vpop.permute.xlu0 %994
      %v997 = vsel %vm934, %v993, 0
      %v1000 = vand.u32 %v995, %v941
      %1002 = vmatpush.bf16.msra.mxu0 0
      %1003 = vmatpush.bf16.msra.mxu0 0
      %1004 = vmatpush.bf16.msra.mxu0 0
      %1005 = vmatpush.bf16.msra.mxu0 0
      %1006 = vmatpush.bf16.msra.mxu0 0
      %1007 = vmatpush.bf16.msra.mxu0 0
      %1008 = vmatpush.bf16.msra.mxu0 0
      %1009 = vmatpush.bf16.msra.mxu0 %v1000
      %1010 = vmatmul.bf16.gmra.mxu0 %v997
      %v1011 = vpop.f32.mrf.mxu0
      %v1012 = vadd.f32 0.0, %v1011
      %v1013 = vpop.f32.mrf.mxu0
      %1014 = vdwg.mxu0
      %1016 = vrot.lane.b32.xlu0 %v1012, 16
      %v1017 = vpop.permute.xlu0 %1016
      %v1019 = vsel %vm899, %v955, %v1017
      %v1020 = vld [vmem:[%s10] sm:$0xff]
      %v1021 = vld [vmem:[%s10 + $0x8] sm:$0xff]
      %v1022 = vld [vmem:[%s10 + $0x10] sm:$0xff]
      %v1023 = vld [vmem:[%s10 + $0x18] sm:$0xff]
      %v1024 = vpack.c.bf16 %v1019, %v1019
      %v1025 = vpack.c.bf16 %v1021, %v1020
      %v1026 = vpack.c.bf16 %v1023, %v1022
      %v1027 = vld [vmem:[%s11] sm:$0x1]
      %v1029 = vperm.slane %v1027, 0
      %v1032 = vsel %vm876, %v1024, 0
      %1034 = vmatpush.bf16.msra.mxu0 0
      %1035 = vmatpush.bf16.msra.mxu0 0
      %1036 = vmatpush.bf16.msra.mxu0 0
      %1037 = vmatpush.bf16.msra.mxu0 0
      %1038 = vmatpush.bf16.msra.mxu0 0
      %1039 = vmatpush.bf16.msra.mxu0 0
      %1040 = vmatpush.bf16.msra.mxu0 %v1026
      %1041 = vmatpush.bf16.msra.mxu0 %v1025
      %1042 = vmatmul.bf16.gmra.mxu0 %v1032
      %v1043 = vpop.f32.mrf.mxu0
      %v1044 = vadd.f32 %v1029, %v1043
      %v1045 = vpop.f32.mrf.mxu0
      %1046 = vdwg.mxu0
      %v1047 = vadd.f32 %v832, %v1044
      %v1048 = vld [vmem:[%s12] sm:$0x1]
      %v1049 = vld [vmem:[%s13] sm:$0x1]
      %v1050 = vsel %vm795, %v1047, 0.0
      %1051 = vadd.xlane.f32.xlu0 %v1050
      %v1052 = vpop.xlane.xlu0 %1051
      %v1053 = vmul.f32 %v1052, %v805
      %v1054 = vsub.f32 %v1047, %v1053
      %v1055 = vmul.f32 %v1054, %v1054
      %v1056 = vsel %vm795, %v1055, 0.0
      %1057 = vadd.xlane.f32.xlu0 %v1056
      %v1058 = vpop.xlane.xlu0 %1057
      %v1059 = vmul.f32 %v1058, %v805
      %v1060 = vadd.f32 %v1059, 1e-05
      %v1061 = vrsqrt.pop %v1060
      %v1062 = vmul.f32 %v1061, %v1060
      %v1063 = vmul.f32 %v1062, %v1061
      %v1064 = vmul.f32 0.5, %v1063
      %v1065 = vsub.f32 1.5, %v1064
      %v1066 = vmul.f32 %v1061, %v1065
      %vm1067 = vweird.f32 %v1060
      %vm1068 = vweird.f32 %v1061
      %vm1069 = vmor %vm1067, %vm1068
      %v1070 = vsel %vm1069, %v1061, %v1066
      %v1071 = vmul.f32 %v1054, %v1070
      %v1073 = vperm.slane %v1048, 0
      %v1075 = vmul.f32 %v1071, %v1073
      %v1077 = vperm.slane %v1049, 0
      %v1079 = vadd.f32 %v1075, %v1077
      %v1080 = vld [vmem:[%s14] sm:$0xff]
      %v1081 = vld [vmem:[%s14 + $0x8] sm:$0xff]
      %v1082 = vld [vmem:[%s14 + $0x10] sm:$0xff]
      %v1083 = vld [vmem:[%s14 + $0x18] sm:$0xff]
      %v1084 = vpack.c.bf16 %v1079, %v1079
      %v1085 = vpack.c.bf16 %v1081, %v1080
      %v1086 = vpack.c.bf16 %v1083, %v1082
      %v1087 = vld [vmem:[%s15] sm:$0x1]
      %v1089 = vperm.slane %v1087, 0
      %v1092 = vsel %vm876, %v1084, 0
      %1094 = vmatpush.bf16.msra.mxu0 0
      %1095 = vmatpush.bf16.msra.mxu0 0
      %1096 = vmatpush.bf16.msra.mxu0 0
      %1097 = vmatpush.bf16.msra.mxu0 0
      %1098 = vmatpush.bf16.msra.mxu0 0
      %1099 = vmatpush.bf16.msra.mxu0 0
      %1100 = vmatpush.bf16.msra.mxu0 %v1086
      %1101 = vmatpush.bf16.msra.mxu0 %v1085
      %1102 = vmatmul.bf16.gmra.mxu0 %v1092
      %v1103 = vpop.f32.mrf.mxu0
      %v1104 = vadd.f32 %v1089, %v1103
      %v1105 = vpop.f32.mrf.mxu0
      %1106 = vdwg.mxu0
      %v1107 = vmul.f32 %v1104, 1.702
      %v1108 = vxor.u32 %v1107, 2147483648
      %v1109 = vmul.f32 %v1108, 1.442695
      %v1110 = vpow.pop %v1109
      %v1111 = vadd.f32 %v1110, 1.0
      %v1112 = vrcp.pop %v1111
      %v1113 = vmul.f32 %v1111, %v1112
      %v1114 = vsub.f32 1.0, %v1113
      %v1115 = vmul.f32 %v1112, %v1114
      %v1116 = vadd.f32 %v1112, %v1115
      %vm1117 = vweird.f32 %v1111
      %vm1118 = vweird.f32 %v1112
      %vm1119 = vmor %vm1117, %vm1118
      %v1120 = vsel %vm1119, %v1112, %v1116
      %v1121 = vand.u32 2147483647, %v1111
      %vm1122 = vcmp.eq.f32.partialorder %v1121, 8.507059e+37
      %v1123 = vand.u32 %v1111, 2147483648
      %v1124 = vor.u32 1.1754944e-38, %v1123
      %v1125 = vsel %vm1122, %v1124, %v1120
      %v1126 = vmul.f32 1.0, %v1125
      %v1127 = vmul.f32 %v1104, %v1126
      %v1128 = vld [vmem:[%s16] sm:$0xff]
      %v1129 = vld [vmem:[%s16 + $0x8] sm:$0xff]
      %v1130 = vld [vmem:[%s16 + $0x10] sm:$0xff]
      %v1131 = vld [vmem:[%s16 + $0x18] sm:$0xff]
      %v1132 = vld [vmem:[%s16 + $0x20] sm:$0xff]
      %v1133 = vld [vmem:[%s16 + $0x28] sm:$0xff]
      %v1134 = vld [vmem:[%s16 + $0x30] sm:$0xff]
      %v1135 = vld [vmem:[%s16 + $0x38] sm:$0xff]
      %v1136 = vpack.c.bf16 %v1127, %v1127
      %v1137 = vpack.c.bf16 %v1129, %v1128
      %v1138 = vpack.c.bf16 %v1131, %v1130
      %v1139 = vpack.c.bf16 %v1133, %v1132
      %v1140 = vpack.c.bf16 %v1135, %v1134
      %v1141 = vld [vmem:[%s17] sm:$0x1]
      %v1143 = vperm.slane %v1141, 0
      %v1146 = vsel %vm755, %v1136, 0
      %1148 = vmatpush.bf16.msra.mxu0 0
      %1149 = vmatpush.bf16.msra.mxu0 0
      %1150 = vmatpush.bf16.msra.mxu0 0
      %1151 = vmatpush.bf16.msra.mxu0 0
      %1152 = vmatpush.bf16.msra.mxu0 %v1140
      %1153 = vmatpush.bf16.msra.mxu0 %v1139
      %1154 = vmatpush.bf16.msra.mxu0 %v1138
      %1155 = vmatpush.bf16.msra.mxu0 %v1137
      %1156 = vmatmul.bf16.gmra.mxu0 %v1146
      %v1157 = vpop.f32.mrf.mxu0
      %v1158 = vadd.f32 %v1143, %v1157
      %v1159 = vpop.f32.mrf.mxu0
      %1160 = vdwg.mxu0
      %v1161 = vadd.f32 %v1047, %v1158
      %s1162 = scalar_lea.vmem %s6, 1
      %v1163 = vld [vmem:[%s1162] sm:$0x1]
      %s1164 = scalar_lea.vmem %s7, 1
      %v1165 = vld [vmem:[%s1164] sm:$0x1]
      %v1166 = vsel %vm795, %v1161, 0.0
      %1167 = vadd.xlane.f32.xlu0 %v1166
      %v1168 = vpop.xlane.xlu0 %1167
      %v1169 = vmul.f32 %v1168, %v805
      %v1170 = vsub.f32 %v1161, %v1169
      %v1171 = vmul.f32 %v1170, %v1170
      %v1172 = vsel %vm795, %v1171, 0.0
      %1173 = vadd.xlane.f32.xlu0 %v1172
      %v1174 = vpop.xlane.xlu0 %1173
      %v1175 = vmul.f32 %v1174, %v805
      %v1176 = vadd.f32 %v1175, 1e-05
      %v1177 = vrsqrt.pop %v1176
      %v1178 = vmul.f32 %v1177, %v1176
      %v1179 = vmul.f32 %v1178, %v1177
      %v1180 = vmul.f32 0.5, %v1179
      %v1181 = vsub.f32 1.5, %v1180
      %v1182 = vmul.f32 %v1177, %v1181
      %vm1183 = vweird.f32 %v1176
      %vm1184 = vweird.f32 %v1177
      %vm1185 = vmor %vm1183, %vm1184
      %v1186 = vsel %vm1185, %v1177, %v1182
      %v1187 = vmul.f32 %v1170, %v1186
      %v1189 = vperm.slane %v1163, 0
      %v1191 = vmul.f32 %v1187, %v1189
      %v1193 = vperm.slane %v1165, 0
      %v1195 = vadd.f32 %v1191, %v1193
      %s1196 = scalar_lea.vmem %s8, 32
      %v1197 = vld [vmem:[%s1196] sm:$0xff]
      %v1198 = vld [vmem:[%s1196 + $0x8] sm:$0xff]
      %v1199 = vld [vmem:[%s1196 + $0x10] sm:$0xff]
      %v1200 = vld [vmem:[%s1196 + $0x18] sm:$0xff]
      %v1201 = vpack.c.bf16 %v1195, %v1195
      %v1202 = vpack.c.bf16 %v1198, %v1197
      %v1203 = vpack.c.bf16 %v1200, %v1199
      %s1204 = scalar_lea.vmem %s9, 1
      %v1205 = vld [vmem:[%s1204] sm:$0x1]
      %v1207 = vperm.slane %v1205, 0
      %v1210 = vsel %vm876, %v1201, 0
      %1212 = vmatpush.bf16.msra.mxu0 0
      %1213 = vmatpush.bf16.msra.mxu0 0
      %1214 = vmatpush.bf16.msra.mxu0 0
      %1215 = vmatpush.bf16.msra.mxu0 0
      %1216 = vmatpush.bf16.msra.mxu0 0
      %1217 = vmatpush.bf16.msra.mxu0 0
      %1218 = vmatpush.bf16.msra.mxu0 %v1203
      %1219 = vmatpush.bf16.msra.mxu0 %v1202
      %1220 = vmatmul.bf16.gmra.mxu0 %v1210
      %v1221 = vpop.f32.mrf.mxu0
      %v1222 = vadd.f32 %v1207, %v1221
      %v1223 = vpop.f32.mrf.mxu0
      %1224 = vdwg.mxu0
      %v1225 = vmul.f32 %v1222, 0.25
      %v1226 = vpack.c.bf16 %v1225, %v1225
      %v1227 = vpack.c.bf16 %v1222, %v1222
      %1229 = vrot.lane.b32.xlu0 %v1227, 96
      %v1230 = vpop.permute.xlu0 %1229
      %v1232 = vsel %vm899, %v1226, 0
      %v1235 = vsel %vm899, %v1230, 0
      %1237 = vmatpush.bf16.xpose.msra.mxu0 0
      %1238 = vmatpush.bf16.xpose.msra.mxu0 0
      %1239 = vmatpush.bf16.xpose.msra.mxu0 0
      %1240 = vmatpush.bf16.xpose.msra.mxu0 0
      %1241 = vmatpush.bf16.xpose.msra.mxu0 0
      %1242 = vmatpush.bf16.xpose.msra.mxu0 0
      %1243 = vmatpush.bf16.xpose.msra.mxu0 0
      %1244 = vmatpush.bf16.xpose.msra.mxu0 %v1235
      %1245 = vmatmul.bf16.gmra.mxu0 %v1232
      %v1246 = vpop.f32.mrf.mxu0
      %v1247 = vadd.f32 0.0, %v1246
      %v1248 = vpop.f32.mrf.mxu0
      %1249 = vdwg.mxu0
      %v1250 = vsel %vm919, %v1247, -inf
      %1251 = vmax.xlane.f32.xlu0 %v1250
      %v1252 = vpop.xlane.xlu0 %1251
      %v1253 = vsub.f32 %v1247, %v1252
      %v1254 = vmul.f32 %v1253, 1.442695
      %v1255 = vpow.pop %v1254
      %v1256 = vsel %vm919, %v1255, 0.0
      %1257 = vadd.xlane.f32.xlu0 %v1256
      %v1258 = vpop.xlane.xlu0 %1257
      %v1259 = vrcp.pop %v1258
      %v1260 = vmul.f32 %v1255, %v1259
      %v1261 = vpack.c.bf16 %v1260, %v1260
      %1262 = vrot.lane.b32.xlu0 %v1227, 64
      %v1263 = vpop.permute.xlu0 %1262
      %v1265 = vsel %vm934, %v1261, 0
      %v1268 = vand.u32 %v1263, %v941
      %1270 = vmatpush.bf16.msra.mxu0 0
      %1271 = vmatpush.bf16.msra.mxu0 0
      %1272 = vmatpush.bf16.msra.mxu0 0
      %1273 = vmatpush.bf16.msra.mxu0 0
      %1274 = vmatpush.bf16.msra.mxu0 0
      %1275 = vmatpush.bf16.msra.mxu0 0
      %1276 = vmatpush.bf16.msra.mxu0 0
      %1277 = vmatpush.bf16.msra.mxu0 %v1268
      %1278 = vmatmul.bf16.gmra.mxu0 %v1265
      %v1279 = vpop.f32.mrf.mxu0
      %v1280 = vadd.f32 0.0, %v1279
      %v1281 = vpop.f32.mrf.mxu0
      %1282 = vdwg.mxu0
      %1284 = vrot.lane.b32.xlu0 %v1226, 112
      %v1285 = vpop.permute.xlu0 %1284
      %1286 = vrot.lane.b32.xlu0 %v1227, 80
      %v1287 = vpop.permute.xlu0 %1286
      %v1289 = vsel %vm899, %v1285, 0
      %v1292 = vsel %vm899, %v1287, 0
      %1294 = vmatpush.bf16.xpose.msra.mxu0 0
      %1295 = vmatpush.bf16.xpose.msra.mxu0 0
      %1296 = vmatpush.bf16.xpose.msra.mxu0 0
      %1297 = vmatpush.bf16.xpose.msra.mxu0 0
      %1298 = vmatpush.bf16.xpose.msra.mxu0 0
      %1299 = vmatpush.bf16.xpose.msra.mxu0 0
      %1300 = vmatpush.bf16.xpose.msra.mxu0 0
      %1301 = vmatpush.bf16.xpose.msra.mxu0 %v1292
      %1302 = vmatmul.bf16.gmra.mxu0 %v1289
      %v1303 = vpop.f32.mrf.mxu0
      %v1304 = vadd.f32 0.0, %v1303
      %v1305 = vpop.f32.mrf.mxu0
      %1306 = vdwg.mxu0
      %v1307 = vsel %vm919, %v1304, -inf
      %1308 = vmax.xlane.f32.xlu0 %v1307
      %v1309 = vpop.xlane.xlu0 %1308
      %v1310 = vsub.f32 %v1304, %v1309
      %v1311 = vmul.f32 %v1310, 1.442695
      %v1312 = vpow.pop %v1311
      %v1313 = vsel %vm919, %v1312, 0.0
      %1314 = vadd.xlane.f32.xlu0 %v1313
      %v1315 = vpop.xlane.xlu0 %1314
      %v1316 = vrcp.pop %v1315
      %v1317 = vmul.f32 %v1312, %v1316
      %v1318 = vpack.c.bf16 %v1317, %v1317
      %1319 = vrot.lane.b32.xlu0 %v1227, 48
      %v1320 = vpop.permute.xlu0 %1319
      %v1322 = vsel %vm934, %v1318, 0
      %v1325 = vand.u32 %v1320, %v941
      %1327 = vmatpush.bf16.msra.mxu0 0
      %1328 = vmatpush.bf16.msra.mxu0 0
      %1329 = vmatpush.bf16.msra.mxu0 0
      %1330 = vmatpush.bf16.msra.mxu0 0
      %1331 = vmatpush.bf16.msra.mxu0 0
      %1332 = vmatpush.bf16.msra.mxu0 0
      %1333 = vmatpush.bf16.msra.mxu0 0
      %1334 = vmatpush.bf16.msra.mxu0 %v1325
      %1335 = vmatmul.bf16.gmra.mxu0 %v1322
      %v1336 = vpop.f32.mrf.mxu0
      %v1337 = vadd.f32 0.0, %v1336
      %v1338 = vpop.f32.mrf.mxu0
      %1339 = vdwg.mxu0
      %1341 = vrot.lane.b32.xlu0 %v1337, 16
      %v1342 = vpop.permute.xlu0 %1341
      %v1344 = vsel %vm899, %v1280, %v1342
      %s1345 = scalar_lea.vmem %s10, 32
      %v1346 = vld [vmem:[%s1345] sm:$0xff]
      %v1347 = vld [vmem:[%s1345 + $0x8] sm:$0xff]
      %v1348 = vld [vmem:[%s1345 + $0x10] sm:$0xff]
      %v1349 = vld [vmem:[%s1345 + $0x18] sm:$0xff]
      %v1350 = vpack.c.bf16 %v1344, %v1344
      %v1351 = vpack.c.bf16 %v1347, %v1346
      %v1352 = vpack.c.bf16 %v1349, %v1348
      %s1353 = scalar_lea.vmem %s11, 1
      %v1354 = vld [vmem:[%s1353] sm:$0x1]
      %v1356 = vperm.slane %v1354, 0
      %v1359 = vsel %vm876, %v1350, 0
      %1361 = vmatpush.bf16.msra.mxu0 0
      %1362 = vmatpush.bf16.msra.mxu0 0
      %1363 = vmatpush.bf16.msra.mxu0 0
      %1364 = vmatpush.bf16.msra.mxu0 0
      %1365 = vmatpush.bf16.msra.mxu0 0
      %1366 = vmatpush.bf16.msra.mxu0 0
      %1367 = vmatpush.bf16.msra.mxu0 %v1352
      %1368 = vmatpush.bf16.msra.mxu0 %v1351
      %1369 = vmatmul.bf16.gmra.mxu0 %v1359
      %v1370 = vpop.f32.mrf.mxu0
      %v1371 = vadd.f32 %v1356, %v1370
      %v1372 = vpop.f32.mrf.mxu0
      %1373 = vdwg.mxu0
      %v1374 = vadd.f32 %v1161, %v1371
      %s1375 = scalar_lea.vmem %s12, 1
      %v1376 = vld [vmem:[%s1375] sm:$0x1]
      %s1377 = scalar_lea.vmem %s13, 1
      %v1378 = vld [vmem:[%s1377] sm:$0x1]
      %v1379 = vsel %vm795, %v1374, 0.0
      %1380 = vadd.xlane.f32.xlu0 %v1379
      %v1381 = vpop.xlane.xlu0 %1380
      %v1382 = vmul.f32 %v1381, %v805
      %v1383 = vsub.f32 %v1374, %v1382
      %v1384 = vmul.f32 %v1383, %v1383
      %v1385 = vsel %vm795, %v1384, 0.0
      %1386 = vadd.xlane.f32.xlu0 %v1385
      %v1387 = vpop.xlane.xlu0 %1386
      %v1388 = vmul.f32 %v1387, %v805
      %v1389 = vadd.f32 %v1388, 1e-05
      %v1390 = vrsqrt.pop %v1389
      %v1391 = vmul.f32 %v1390, %v1389
      %v1392 = vmul.f32 %v1391, %v1390
      %v1393 = vmul.f32 0.5, %v1392
      %v1394 = vsub.f32 1.5, %v1393
      %v1395 = vmul.f32 %v1390, %v1394
      %vm1396 = vweird.f32 %v1389
      %vm1397 = vweird.f32 %v1390
      %vm1398 = vmor %vm1396, %vm1397
      %v1399 = vsel %vm1398, %v1390, %v1395
      %v1400 = vmul.f32 %v1383, %v1399
      %v1402 = vperm.slane %v1376, 0
      %v1404 = vmul.f32 %v1400, %v1402
      %v1406 = vperm.slane %v1378, 0
      %v1408 = vadd.f32 %v1404, %v1406
      %s1409 = scalar_lea.vmem %s14, 32
      %v1410 = vld [vmem:[%s1409] sm:$0xff]
      %v1411 = vld [vmem:[%s1409 + $0x8] sm:$0xff]
      %v1412 = vld [vmem:[%s1409 + $0x10] sm:$0xff]
      %v1413 = vld [vmem:[%s1409 + $0x18] sm:$0xff]
      %v1414 = vpack.c.bf16 %v1408, %v1408
      %v1415 = vpack.c.bf16 %v1411, %v1410
      %v1416 = vpack.c.bf16 %v1413, %v1412
      %s1417 = scalar_lea.vmem %s15, 1
      %v1418 = vld [vmem:[%s1417] sm:$0x1]
      %v1420 = vperm.slane %v1418, 0
      %v1423 = vsel %vm876, %v1414, 0
      %1425 = vmatpush.bf16.msra.mxu0 0
      %1426 = vmatpush.bf16.msra.mxu0 0
      %1427 = vmatpush.bf16.msra.mxu0 0
      %1428 = vmatpush.bf16.msra.mxu0 0
      %1429 = vmatpush.bf16.msra.mxu0 0
      %1430 = vmatpush.bf16.msra.mxu0 0
      %1431 = vmatpush.bf16.msra.mxu0 %v1416
      %1432 = vmatpush.bf16.msra.mxu0 %v1415
      %1433 = vmatmul.bf16.gmra.mxu0 %v1423
      %v1434 = vpop.f32.mrf.mxu0
      %v1435 = vadd.f32 %v1420, %v1434
      %v1436 = vpop.f32.mrf.mxu0
      %1437 = vdwg.mxu0
      %v1438 = vmul.f32 %v1435, 1.702
      %v1439 = vxor.u32 %v1438, 2147483648
      %v1440 = vmul.f32 %v1439, 1.442695
      %v1441 = vpow.pop %v1440
      %v1442 = vadd.f32 %v1441, 1.0
      %v1443 = vrcp.pop %v1442
      %v1444 = vmul.f32 %v1442, %v1443
      %v1445 = vsub.f32 1.0, %v1444
      %v1446 = vmul.f32 %v1443, %v1445
      %v1447 = vadd.f32 %v1443, %v1446
      %vm1448 = vweird.f32 %v1442
      %vm1449 = vweird.f32 %v1443
      %vm1450 = vmor %vm1448, %vm1449
      %v1451 = vsel %vm1450, %v1443, %v1447
      %v1452 = vand.u32 2147483647, %v1442
      %vm1453 = vcmp.eq.f32.partialorder %v1452, 8.507059e+37
      %v1454 = vand.u32 %v1442, 2147483648
      %v1455 = vor.u32 1.1754944e-38, %v1454
      %v1456 = vsel %vm1453, %v1455, %v1451
      %v1457 = vmul.f32 1.0, %v1456
      %v1458 = vmul.f32 %v1435, %v1457
      %s1459 = scalar_lea.vmem %s16, 64
      %v1460 = vld [vmem:[%s1459] sm:$0xff]
      %v1461 = vld [vmem:[%s1459 + $0x8] sm:$0xff]
      %v1462 = vld [vmem:[%s1459 + $0x10] sm:$0xff]
      %v1463 = vld [vmem:[%s1459 + $0x18] sm:$0xff]
      %v1464 = vld [vmem:[%s1459 + $0x20] sm:$0xff]
      %v1465 = vld [vmem:[%s1459 + $0x28] sm:$0xff]
      %v1466 = vld [vmem:[%s1459 + $0x30] sm:$0xff]
      %v1467 = vld [vmem:[%s1459 + $0x38] sm:$0xff]
      %v1468 = vpack.c.bf16 %v1458, %v1458
      %v1469 = vpack.c.bf16 %v1461, %v1460
      %v1470 = vpack.c.bf16 %v1463, %v1462
      %v1471 = vpack.c.bf16 %v1465, %v1464
      %v1472 = vpack.c.bf16 %v1467, %v1466
      %s1473 = scalar_lea.vmem %s17, 1
      %v1474 = vld [vmem:[%s1473] sm:$0x1]
      %v1476 = vperm.slane %v1474, 0
      %v1479 = vsel %vm755, %v1468, 0
      %1481 = vmatpush.bf16.msra.mxu0 0
      %1482 = vmatpush.bf16.msra.mxu0 0
      %1483 = vmatpush.bf16.msra.mxu0 0
      %1484 = vmatpush.bf16.msra.mxu0 0
      %1485 = vmatpush.bf16.msra.mxu0 %v1472
      %1486 = vmatpush.bf16.msra.mxu0 %v1471
      %1487 = vmatpush.bf16.msra.mxu0 %v1470
      %1488 = vmatpush.bf16.msra.mxu0 %v1469
      %1489 = vmatmul.bf16.gmra.mxu0 %v1479
      %v1490 = vpop.f32.mrf.mxu0
      %v1491 = vadd.f32 %v1476, %v1490
      %v1492 = vpop.f32.mrf.mxu0
      %1493 = vdwg.mxu0
      %v1494 = vadd.f32 %v1374, %v1491
      %v1495 = vld [vmem:[%s18] sm:$0x1]
      %v1496 = vld [vmem:[%s19] sm:$0x1]
      %vm1497 = vcmask 253952
      %v1498 = vsel %vm1497, %v1494, 0.0
      %1499 = vadd.xlane.f32.xlu0 %v1498
      %v1500 = vpop.xlane.xlu0 %1499
      %v1501 = vmul.f32 %v1500, %v805
      %v1502 = vsub.f32 %v1494, %v1501
      %v1503 = vmul.f32 %v1502, %v1502
      %v1504 = vsel %vm1497, %v1503, 0.0
      %1505 = vadd.xlane.f32.xlu0 %v1504
      %v1506 = vpop.xlane.xlu0 %1505
      %v1507 = vmul.f32 %v1506, %v805
      %v1508 = vadd.f32 %v1507, 1e-05
      %v1509 = vrsqrt.pop %v1508
      %v1510 = vmul.f32 %v1509, %v1508
      %v1511 = vmul.f32 %v1510, %v1509
      %v1512 = vmul.f32 0.5, %v1511
      %v1513 = vsub.f32 1.5, %v1512
      %v1514 = vmul.f32 %v1509, %v1513
      %vm1515 = vweird.f32 %v1508
      %vm1516 = vweird.f32 %v1509
      %vm1517 = vmor %vm1515, %vm1516
      %v1518 = vsel %vm1517, %v1509, %v1514
      %v1519 = vmul.f32 %v1502, %v1518
      %v1520 = vmul.f32 %v1519, %v1495
      %v1521 = vadd.f32 %v1520, %v1496
      %v1522 = vld [vmem:[%s20] sm:$0xff]
      %v1523 = vld [vmem:[%s20 + $0x8] sm:$0xff]
      %v1524 = vld [vmem:[%s20 + $0x10] sm:$0xff]
      %v1525 = vld [vmem:[%s20 + $0x18] sm:$0xff]
      %v1526 = vpack.c.bf16 %v1521, %v1521
      %v1527 = vpack.c.bf16 %v1523, %v1522
      %v1528 = vpack.c.bf16 %v1525, %v1524
      %v1530 = vsel %vm876, %v1526, 0
      %1532 = vmatpush.bf16.msra.mxu0 0
      %1533 = vmatpush.bf16.msra.mxu0 0
      %1534 = vmatpush.bf16.msra.mxu0 0
      %1535 = vmatpush.bf16.msra.mxu0 0
      %1536 = vmatpush.bf16.msra.mxu0 0
      %1537 = vmatpush.bf16.msra.mxu0 0
      %1538 = vmatpush.bf16.msra.mxu0 %v1528
      %1539 = vmatpush.bf16.msra.mxu0 %v1527
      %1540 = vmatmul.bf16.gmra.mxu0 %v1530
      %v1541 = vpop.f32.mrf.mxu0
      %v1542 = vadd.f32 0.0, %v1541
      %v1543 = vpop.f32.mrf.mxu0
      %1544 = vdwg.mxu0
      %v1545 = vld [vmem:[%s21] sm:$0xff]
      %v1546 = vld [vmem:[%s21 + $0x8] sm:$0xff]
      %v1547 = vpack.c.bf16 %v1542, %v1542
      %v1548 = vpack.c.bf16 %v1546, %v1545
      %v1549 = vld [vmem:[%s22] sm:$0x1]
      %v1551 = vsel %vm899, %v1547, 0
      %1553 = vmatpush.bf16.msra.mxu0 0
      %1554 = vmatpush.bf16.msra.mxu0 0
      %1555 = vmatpush.bf16.msra.mxu0 0
      %1556 = vmatpush.bf16.msra.mxu0 0
      %1557 = vmatpush.bf16.msra.mxu0 0
      %1558 = vmatpush.bf16.msra.mxu0 0
      %1559 = vmatpush.bf16.msra.mxu0 0
      %1560 = vmatpush.bf16.msra.mxu0 %v1548
      %1561 = vmatmul.bf16.gmra.mxu0 %v1551
      %v1562 = vpop.f32.mrf.mxu0
      %v1563 = vadd.f32 %v1549, %v1562
      %v1564 = vpop.f32.mrf.mxu0
      %1565 = vdwg.mxu0
      %v1566 = vsel %vm789, %v1563, 0.0
      %vm1567 = vcmask 64512
      %v1568 = vsel %vm1567, %v1566, 0.0
      %1569 = vst [vmem:[%s708] sm:$0xff] %v1568
      %p1570 = scmp.lt.s32.totalorder %s34, 1
      %s1571 = scalar_select %p1570, %s34, 1
      %s1572 = smul.addr %s1571, 8
      %s1573 = scalar_lea.vmem %s23, %s1572
      // Predicated region
      $region113: #{clip_finetuner_forward.1} parent=111 // pred_check
        %p1574 = pneg %p540
      $region114: #{clip_finetuner_forward.1} parent=111 // pred_check_branch
        %1576 = sbr.rel (%p1574) target = $region116
      $region115: #{clip_finetuner_forward.1} parent=111 // pred_region
        _
      $region116: #{clip_finetuner_forward.1} parent=111 // pred_fallthru
        _
    $region112: #{clip_finetuner_forward.1} parent=5 // pred_fallthru
      _
    %p1577 = scmp.le.s32.totalorder 2, %s29
    // Predicated region
    $region117: #{clip_finetuner_forward.1} parent=5 // pred_check
      %p1578 = pneg %p1577
    $region118: #{clip_finetuner_forward.1} parent=5 // pred_check_branch
      %1580 = sbr.rel (%p1578) target = $region120
    $region119: #{clip_finetuner_forward.1} parent=5 // pred_region
      %s1581 = ssub.s32 %s29, 2
      // Predicated region
      $region121: #{clip_finetuner_forward.1} parent=119 // pred_check
        %p1582 = pneg %p546
      $region122: #{clip_finetuner_forward.1} parent=119 // pred_check_branch
        %1584 = sbr.rel (%p1582) target = $region124
      $region123: #{clip_finetuner_forward.1} parent=119 // pred_region
        %p1585 = scmp.lt.s32.totalorder %s35, 1
        %s1586 = scalar_select %p1585, %s35, 1
        %s1587 = smul.addr %s1586, 8
        %s1588 = scalar_lea.vmem %s23, %s1587
      $region124: #{clip_finetuner_forward.1} parent=119 // pred_fallthru
        _
    $region120: #{clip_finetuner_forward.1} parent=5 // pred_fallthru
      _
  $region6: #{clip_finetuner_forward.1} parent=0 // loop_footer
    %s33 = sadd.s32 1, %s29
  $region7: #{clip_finetuner_forward.1} parent=0 // loop_footer_branch
    %28 = sbr.rel target = $region3
  $region8: #{clip_finetuner_forward.1} parent=0 // loop_exit
    _

</llo_original>
